<compile_context>
chip_gen: v7x
topology: tpu7x:2x2x1
jax: 0.10.0
libtpu: 0.0.40
codegen_flags: <defaults>
</compile_context>

<pallas_src>
import functools

import jax
import jax.numpy as jnp
from jax import lax
from jax.experimental import pallas as pl
from jax.experimental.pallas import tpu as pltpu


# ----------------------------------------------------------------------------
# Fused Inception kernel (one batch element per grid step, channels-first)
# ----------------------------------------------------------------------------
def _inception_kernel(x_ref,
                      w1_ref, b1_ref,
                      w2r_ref, b2r_ref, w3_ref, b3_ref,
                      w3r_ref, b3r_ref, w5_ref, b5_ref,
                      wp_ref, bp_ref,
                      o_ref, *, W, ch1x1, ch3, ch5):
    M = x_ref.shape[-1]                                       # H * W
    x = x_ref[...].astype(jnp.float32)                        # (Cin, M)

    # Column-validity masks for horizontal shifts (built once, reused by the
    # 3x3 / 5x5 im2col taps and the maxpool taps).
    col = lax.broadcasted_iota(jnp.int32, (1, M), 1) % W
    col_ok = {sx: (col + sx >= 0) & (col + sx < W) for sx in (-2, -1, 1, 2)}

    def tap(a, sy, sx, fill):
        """view[c, y*W + x] = a[c, (y+sy)*W + (x+sx)] if inside image else fill."""
        s = sy * W + sx
        if s == 0:
            v = a
        else:
            pad = jnp.full((a.shape[0], abs(s)), fill, a.dtype)
            v = (jnp.concatenate([a[:, s:], pad], axis=1) if s > 0
                 else jnp.concatenate([pad, a[:, :s]], axis=1))
        if sx != 0:
            # Row over/underflow is either already fill-padded by the flat
            # shift or caught by the column mask, so only a column mask needed.
            v = jnp.where(col_ok[sx], v, fill)
        return v

    def conv1x1_relu(inp, w_ref, b_ref):
        y = jnp.dot(w_ref[...], inp, preferred_element_type=jnp.float32)
        return jnp.maximum(y + b_ref[...], 0.0)

    # ---- branch1: 1x1 conv + ReLU -> straight into its channel range.
    o_ref[0:ch1x1, :] = conv1x1_relu(x, w1_ref, b1_ref).astype(o_ref.dtype)

    # ---- branch2: 1x1 reduce + ReLU, then 3x3 'same' conv as ONE im2col matmul.
    r2 = conv1x1_relu(x, w2r_ref, b2r_ref)                    # (ch3r, M)
    slab3 = jnp.concatenate(
        [tap(r2, sy, sx, 0.0) for sy in (-1, 0, 1) for sx in (-1, 0, 1)],
        axis=0)                                               # (9*ch3r, M)
    y3 = jnp.dot(w3_ref[...], slab3, preferred_element_type=jnp.float32)
    o_ref[ch1x1:ch1x1 + ch3, :] = jnp.maximum(
        y3 + b3_ref[...], 0.0).astype(o_ref.dtype)

    # ---- branch3: 1x1 reduce + ReLU, then 5x5 'same' conv as ONE im2col matmul.
    r3 = conv1x1_relu(x, w3r_ref, b3r_ref)                    # (ch5r, M)
    slab5 = jnp.concatenate(
        [tap(r3, sy, sx, 0.0)
         for sy in (-2, -1, 0, 1, 2) for sx in (-2, -1, 0, 1, 2)],
        axis=0)                                               # (25*ch5r, M)
    y5 = jnp.dot(w5_ref[...], slab5, preferred_element_type=jnp.float32)
    c3 = ch1x1 + ch3
    o_ref[c3:c3 + ch5, :] = jnp.maximum(
        y5 + b5_ref[...], 0.0).astype(o_ref.dtype)

    # ---- branch4: 3x3 maxpool (stride 1, pad 1) fused with 1x1 conv + ReLU.
    neg = jnp.float32(-jnp.inf)
    pooled = x                                                # center tap
    for sy in (-1, 0, 1):
        for sx in (-1, 0, 1):
            if sy == 0 and sx == 0:
                continue
            pooled = jnp.maximum(pooled, tap(x, sy, sx, neg))
    c4 = c3 + ch5
    chpool = o_ref.shape[0] - c4
    o_ref[c4:c4 + chpool, :] = conv1x1_relu(
        pooled, wp_ref, bp_ref).astype(o_ref.dtype)


# ----------------------------------------------------------------------------
# Parameters (PyTorch Conv2d-style init)
# ----------------------------------------------------------------------------
def init_inception_params(key, in_ch, ch1x1, ch3x3_redu, ch3x3,
                          ch5x5_redu, ch5x5, ch1x1_pool):
    def conv_params(k, ksize, cin, cout):
        kw, kb = jax.random.split(k)
        bound = 1.0 / jnp.sqrt(float(cin * ksize * ksize))
        if ksize == 1:
            w = jax.random.uniform(kw, (cin, cout), jnp.float32, -bound, bound)
        else:
            w = jax.random.uniform(kw, (ksize, ksize, cin, cout),
                                   jnp.float32, -bound, bound)
        b = jax.random.uniform(kb, (cout,), jnp.float32, -bound, bound)
        return w, b

    keys = jax.random.split(key, 6)
    return {
        "branch1": conv_params(keys[0], 1, in_ch, ch1x1),
        "branch2_reduce": conv_params(keys[1], 1, in_ch, ch3x3_redu),
        "branch2_conv": conv_params(keys[2], 3, ch3x3_redu, ch3x3),
        "branch3_reduce": conv_params(keys[3], 1, in_ch, ch5x5_redu),
        "branch3_conv": conv_params(keys[4], 5, ch5x5_redu, ch5x5),
        "branch4_conv": conv_params(keys[5], 1, in_ch, ch1x1_pool),
    }


# ----------------------------------------------------------------------------
# Forward wrapper (NCHW in, NCHW out — no transposes, only free reshapes)
# ----------------------------------------------------------------------------
def inception_forward(x_nchw, params):
    N, Cin, H, W = x_nchw.shape
    M = H * W

    w1, b1 = params["branch1"]
    w2r, b2r = params["branch2_reduce"]
    w3, b3 = params["branch2_conv"]
    w3r, b3r = params["branch3_reduce"]
    w5, b5 = params["branch3_conv"]
    wp, bp = params["branch4_conv"]

    ch1x1 = w1.shape[1]
    ch3r, ch3 = w3.shape[2], w3.shape[3]
    ch5r, ch5 = w5.shape[2], w5.shape[3]
    chpool = wp.shape[1]
    c_total = ch1x1 + ch3 + ch5 + chpool

    # Pre-arrange weights so every conv is a single (Cout, K) x (K, M) matmul.
    w1_t = w1.T                                   # (ch1x1, Cin)
    w2r_t = w2r.T                                 # (ch3r, Cin)
    w3r_t = w3r.T                                 # (ch5r, Cin)
    wp_t = wp.T                                   # (chpool, Cin)
    w3_t = w3.reshape(9 * ch3r, ch3).T            # (ch3, 9*ch3r), (dy,dx,ci) order
    w5_t = w5.reshape(25 * ch5r, ch5).T           # (ch5, 25*ch5r)

    x_flat = x_nchw.reshape(N, Cin, M)            # free: NCHW is contiguous

    kernel = functools.partial(
        _inception_kernel, W=W, ch1x1=ch1x1, ch3=ch3, ch5=ch5)

    def _rep(shape):
        return pl.BlockSpec(shape, lambda n: (0,) * len(shape))

    out = pl.pallas_call(
        kernel,
        out_shape=jax.ShapeDtypeStruct((N, c_total, M), x_nchw.dtype),
        grid=(N,),
        in_specs=[
            pl.BlockSpec((None, Cin, M), lambda n: (n, 0, 0)),
            _rep(w1_t.shape), _rep((ch1x1, 1)),
            _rep(w2r_t.shape), _rep((ch3r, 1)),
            _rep(w3_t.shape), _rep((ch3, 1)),
            _rep(w3r_t.shape), _rep((ch5r, 1)),
            _rep(w5_t.shape), _rep((ch5, 1)),
            _rep(wp_t.shape), _rep((chpool, 1)),
        ],
        out_specs=pl.BlockSpec((None, c_total, M), lambda n: (n, 0, 0)),
        compiler_params=pltpu.CompilerParams(
            dimension_semantics=("parallel",)),
    )(x_flat,
      w1_t, b1.reshape(ch1x1, 1),
      w2r_t, b2r.reshape(ch3r, 1), w3_t, b3.reshape(ch3, 1),
      w3r_t, b3r.reshape(ch5r, 1), w5_t, b5.reshape(ch5, 1),
      wp_t, bp.reshape(chpool, 1))

    return out.reshape(N, c_total, H, W)          # free reshape, already NCHW


# ----------------------------------------------------------------------------
# Pure-JAX reference (for correctness check only)
# ----------------------------------------------------------------------------
def _ref_conv_relu(x_nhwc, w_hwio, b, pad):
    y = jax.lax.conv_general_dilated(
        x_nhwc, w_hwio, (1, 1), [(pad, pad), (pad, pad)],
        dimension_numbers=("NHWC", "HWIO", "NHWC"))
    return jnp.maximum(y + b, 0.0)


def _ref_maxpool(x_nhwc):
    return jax.lax.reduce_window(
        x_nhwc, -jnp.inf, jax.lax.max, (1, 3, 3, 1), (1, 1, 1, 1),
        [(0, 0), (1, 1), (1, 1), (0, 0)])


def inception_reference(x_nchw, params):
    x = jnp.transpose(x_nchw, (0, 2, 3, 1))
    w1, bb1 = params["branch1"]
    b1 = _ref_conv_relu(x, w1[None, None], bb1, 0)
    w2r, b2r = params["branch2_reduce"]
    w2, bb2 = params["branch2_conv"]
    b2 = _ref_conv_relu(_ref_conv_relu(x, w2r[None, None], b2r, 0), w2, bb2, 1)
    w3r, b3r = params["branch3_reduce"]
    w3, bb3 = params["branch3_conv"]
    b3 = _ref_conv_relu(_ref_conv_relu(x, w3r[None, None], b3r, 0), w3, bb3, 2)
    w4, bb4 = params["branch4_conv"]
    b4 = _ref_conv_relu(_ref_maxpool(x), w4[None, None], bb4, 0)
    y = jnp.concatenate([b1, b2, b3, b4], axis=-1)
    return jnp.transpose(y, (0, 3, 1, 2))


if __name__ == "__main__":
    key = jax.random.PRNGKey(0)
    kx, kp = jax.random.split(key)

    # Small shapes consistent with the module: N=2, in_channel=4, 16x16 spatial
    in_ch, ch1x1, ch3r, ch3, ch5r, ch5, chpool = 4, 8, 4, 8, 4, 8, 8
    x = jax.random.normal(kx, (2, in_ch, 16, 16), jnp.float32)
    params = init_inception_params(kp, in_ch, ch1x1, ch3r, ch3, ch5r, ch5, chpool)

    out = inception_forward(x, params)
    out = jax.block_until_ready(out)
    assert out.shape == (2, ch1x1 + ch3 + ch5 + chpool, 16, 16), out.shape

    ref = jax.block_until_ready(inception_reference(x, params))
    assert jnp.allclose(out, ref, atol=1e-4, rtol=1e-4), float(
        jnp.max(jnp.abs(out - ref)))

    print("KERNEL_OK")
</pallas_src>

<mosaic_0001>
module attributes {stable_mosaic.version = 11 : i64} {
  func.func @_inception_kernel(%arg0: i32, %arg1: memref<1x4x256xf32, #tpu.memory_space<vmem>>, %arg2: memref<8x4xf32, #tpu.memory_space<vmem>>, %arg3: memref<8x1xf32, #tpu.memory_space<vmem>>, %arg4: memref<4x4xf32, #tpu.memory_space<vmem>>, %arg5: memref<4x1xf32, #tpu.memory_space<vmem>>, %arg6: memref<8x36xf32, #tpu.memory_space<vmem>>, %arg7: memref<8x1xf32, #tpu.memory_space<vmem>>, %arg8: memref<4x4xf32, #tpu.memory_space<vmem>>, %arg9: memref<4x1xf32, #tpu.memory_space<vmem>>, %arg10: memref<8x100xf32, #tpu.memory_space<vmem>>, %arg11: memref<8x1xf32, #tpu.memory_space<vmem>>, %arg12: memref<8x4xf32, #tpu.memory_space<vmem>>, %arg13: memref<8x1xf32, #tpu.memory_space<vmem>>, %arg14: memref<1x32x256xf32, #tpu.memory_space<vmem>>) attributes {dimension_semantics = [#tpu.dimension_semantics<parallel>], iteration_bounds = array<i64: 2>, scalar_prefetch = 0 : i64, scratch_operands = 0 : i64, tpu.core_type = #tpu.core_type<tc>, window_params = [{transform_indices = @transform_0, window_bounds = array<i64: 1, 4, 256>}, {pipeline_mode = #tpu.pipeline_mode<synchronous>, transform_indices = @transform_1, window_bounds = array<i64: 8, 4>}, {pipeline_mode = #tpu.pipeline_mode<synchronous>, transform_indices = @transform_2, window_bounds = array<i64: 8, 1>}, {pipeline_mode = #tpu.pipeline_mode<synchronous>, transform_indices = @transform_3, window_bounds = array<i64: 4, 4>}, {pipeline_mode = #tpu.pipeline_mode<synchronous>, transform_indices = @transform_4, window_bounds = array<i64: 4, 1>}, {pipeline_mode = #tpu.pipeline_mode<synchronous>, transform_indices = @transform_5, window_bounds = array<i64: 8, 36>}, {pipeline_mode = #tpu.pipeline_mode<synchronous>, transform_indices = @transform_6, window_bounds = array<i64: 8, 1>}, {pipeline_mode = #tpu.pipeline_mode<synchronous>, transform_indices = @transform_7, window_bounds = array<i64: 4, 4>}, {pipeline_mode = #tpu.pipeline_mode<synchronous>, transform_indices = @transform_8, window_bounds = array<i64: 4, 1>}, {pipeline_mode = #tpu.pipeline_mode<synchronous>, transform_indices = @transform_9, window_bounds = array<i64: 8, 100>}, {pipeline_mode = #tpu.pipeline_mode<synchronous>, transform_indices = @transform_10, window_bounds = array<i64: 8, 1>}, {pipeline_mode = #tpu.pipeline_mode<synchronous>, transform_indices = @transform_11, window_bounds = array<i64: 8, 4>}, {pipeline_mode = #tpu.pipeline_mode<synchronous>, transform_indices = @transform_12, window_bounds = array<i64: 8, 1>}, {transform_indices = @transform_13, window_bounds = array<i64: 1, 32, 256>}]} {
    %c0 = arith.constant 0 : index
    %c0_0 = arith.constant 0 : index
    %c0_1 = arith.constant 0 : index
    %0 = vector.load %arg1[%c0, %c0_0, %c0_1] : memref<1x4x256xf32, #tpu.memory_space<vmem>>, vector<1x4x256xf32>
    %1 = vector.shape_cast %0 : vector<1x4x256xf32> to vector<4x256xf32>
    %2 = tpu.iota {dimensions = array<i32: 1>} : vector<1x256xi32>
    %c16_i32 = arith.constant 16 : i32
    %c0_i32 = arith.constant 0 : i32
    %3 = arith.cmpi eq, %c16_i32, %c0_i32 : i32
    %c1_i32 = arith.constant 1 : i32
    %4 = arith.select %3, %c1_i32, %c16_i32 : i32
    %5 = vector.broadcast %4 : i32 to vector<1x256xi32>
    %6 = arith.remsi %2, %5 : vector<1x256xi32>
    %c0_i32_2 = arith.constant 0 : i32
    %7 = vector.broadcast %c0_i32_2 : i32 to vector<1x256xi32>
    %8 = arith.cmpi ne, %6, %7 : vector<1x256xi32>
    %c0_i32_3 = arith.constant 0 : i32
    %9 = vector.broadcast %c0_i32_3 : i32 to vector<1x256xi32>
    %10 = arith.cmpi slt, %6, %9 : vector<1x256xi32>
    %c0_i32_4 = arith.constant 0 : i32
    %11 = arith.cmpi slt, %4, %c0_i32_4 : i32
    %12 = vector.broadcast %11 : i1 to vector<1x256xi1>
    %13 = vector.broadcast %12 : vector<1x256xi1> to vector<1x256xi1>
    %14 = arith.xori %10, %13 : vector<1x256xi1>
    %15 = arith.andi %14, %8 : vector<1x256xi1>
    %16 = vector.broadcast %4 : i32 to vector<1x256xi32>
    %17 = arith.addi %6, %16 : vector<1x256xi32>
    %18 = arith.select %15, %17, %6 : vector<1x256xi1>, vector<1x256xi32>
    %c-2_i32 = arith.constant -2 : i32
    %19 = vector.broadcast %c-2_i32 : i32 to vector<1x256xi32>
    %20 = arith.addi %18, %19 : vector<1x256xi32>
    %c0_i32_5 = arith.constant 0 : i32
    %21 = vector.broadcast %c0_i32_5 : i32 to vector<1x256xi32>
    %22 = arith.cmpi sge, %20, %21 : vector<1x256xi32>
    %c-2_i32_6 = arith.constant -2 : i32
    %23 = vector.broadcast %c-2_i32_6 : i32 to vector<1x256xi32>
    %24 = arith.addi %18, %23 : vector<1x256xi32>
    %c16_i32_7 = arith.constant 16 : i32
    %25 = vector.broadcast %c16_i32_7 : i32 to vector<1x256xi32>
    %26 = arith.cmpi slt, %24, %25 : vector<1x256xi32>
    %27 = arith.andi %22, %26 : vector<1x256xi1>
    %c-1_i32 = arith.constant -1 : i32
    %28 = vector.broadcast %c-1_i32 : i32 to vector<1x256xi32>
    %29 = arith.addi %18, %28 : vector<1x256xi32>
    %c0_i32_8 = arith.constant 0 : i32
    %30 = vector.broadcast %c0_i32_8 : i32 to vector<1x256xi32>
    %31 = arith.cmpi sge, %29, %30 : vector<1x256xi32>
    %c-1_i32_9 = arith.constant -1 : i32
    %32 = vector.broadcast %c-1_i32_9 : i32 to vector<1x256xi32>
    %33 = arith.addi %18, %32 : vector<1x256xi32>
    %c16_i32_10 = arith.constant 16 : i32
    %34 = vector.broadcast %c16_i32_10 : i32 to vector<1x256xi32>
    %35 = arith.cmpi slt, %33, %34 : vector<1x256xi32>
    %36 = arith.andi %31, %35 : vector<1x256xi1>
    %c1_i32_11 = arith.constant 1 : i32
    %37 = vector.broadcast %c1_i32_11 : i32 to vector<1x256xi32>
    %38 = arith.addi %18, %37 : vector<1x256xi32>
    %c0_i32_12 = arith.constant 0 : i32
    %39 = vector.broadcast %c0_i32_12 : i32 to vector<1x256xi32>
    %40 = arith.cmpi sge, %38, %39 : vector<1x256xi32>
    %c1_i32_13 = arith.constant 1 : i32
    %41 = vector.broadcast %c1_i32_13 : i32 to vector<1x256xi32>
    %42 = arith.addi %18, %41 : vector<1x256xi32>
    %c16_i32_14 = arith.constant 16 : i32
    %43 = vector.broadcast %c16_i32_14 : i32 to vector<1x256xi32>
    %44 = arith.cmpi slt, %42, %43 : vector<1x256xi32>
    %45 = arith.andi %40, %44 : vector<1x256xi1>
    %c2_i32 = arith.constant 2 : i32
    %46 = vector.broadcast %c2_i32 : i32 to vector<1x256xi32>
    %47 = arith.addi %18, %46 : vector<1x256xi32>
    %c0_i32_15 = arith.constant 0 : i32
    %48 = vector.broadcast %c0_i32_15 : i32 to vector<1x256xi32>
    %49 = arith.cmpi sge, %47, %48 : vector<1x256xi32>
    %c2_i32_16 = arith.constant 2 : i32
    %50 = vector.broadcast %c2_i32_16 : i32 to vector<1x256xi32>
    %51 = arith.addi %18, %50 : vector<1x256xi32>
    %c16_i32_17 = arith.constant 16 : i32
    %52 = vector.broadcast %c16_i32_17 : i32 to vector<1x256xi32>
    %53 = arith.cmpi slt, %51, %52 : vector<1x256xi32>
    %54 = arith.andi %49, %53 : vector<1x256xi1>
    %c0_18 = arith.constant 0 : index
    %c0_19 = arith.constant 0 : index
    %55 = vector.load %arg2[%c0_18, %c0_19] : memref<8x4xf32, #tpu.memory_space<vmem>>, vector<8x4xf32>
    %cst = arith.constant dense<0.000000e+00> : vector<8x256xf32>
    %56 = tpu.matmul %55, %1, %cst {dimension_numbers = #tpu.dot_dimension_numbers<[1], [0], [0], [1], [0, 0, 1, 1], [], []>} : vector<8x4xf32>, vector<4x256xf32>, vector<8x256xf32> -> vector<8x256xf32>
    %c0_20 = arith.constant 0 : index
    %c0_21 = arith.constant 0 : index
    %57 = vector.load %arg3[%c0_20, %c0_21] : memref<8x1xf32, #tpu.memory_space<vmem>>, vector<8x1xf32>
    %58 = vector.broadcast %57 : vector<8x1xf32> to vector<8x256xf32>
    %59 = arith.addf %56, %58 : vector<8x256xf32>
    %cst_22 = arith.constant 0.000000e+00 : f32
    %60 = vector.broadcast %cst_22 : f32 to vector<8x256xf32>
    %61 = arith.maximumf %59, %60 : vector<8x256xf32>
    %c0_23 = arith.constant 0 : index
    %c0_24 = arith.constant 0 : index
    %c0_25 = arith.constant 0 : index
    %62 = vector.load %arg14[%c0_23, %c0_24, %c0_25] : memref<1x32x256xf32, #tpu.memory_space<vmem>>, vector<1x8x256xf32>
    %63 = vector.shape_cast %62 : vector<1x8x256xf32> to vector<8x256xf32>
    %64 = vector.shape_cast %61 : vector<8x256xf32> to vector<1x8x256xf32>
    tpu.vector_store %arg14[%c0_23, %c0_24, %c0_25], %64 {strides = array<i32>} : memref<1x32x256xf32, #tpu.memory_space<vmem>>, vector<1x8x256xf32>,
    %c0_26 = arith.constant 0 : index
    %c0_27 = arith.constant 0 : index
    %65 = vector.load %arg4[%c0_26, %c0_27] : memref<4x4xf32, #tpu.memory_space<vmem>>, vector<4x4xf32>
    %cst_28 = arith.constant dense<0.000000e+00> : vector<4x256xf32>
    %66 = tpu.matmul %65, %1, %cst_28 {dimension_numbers = #tpu.dot_dimension_numbers<[1], [0], [0], [1], [0, 0, 1, 1], [], []>} : vector<4x4xf32>, vector<4x256xf32>, vector<4x256xf32> -> vector<4x256xf32>
    %c0_29 = arith.constant 0 : index
    %c0_30 = arith.constant 0 : index
    %67 = vector.load %arg5[%c0_29, %c0_30] : memref<4x1xf32, #tpu.memory_space<vmem>>, vector<4x1xf32>
    %68 = vector.broadcast %67 : vector<4x1xf32> to vector<4x256xf32>
    %69 = arith.addf %66, %68 : vector<4x256xf32>
    %cst_31 = arith.constant 0.000000e+00 : f32
    %70 = vector.broadcast %cst_31 : f32 to vector<4x256xf32>
    %71 = arith.maximumf %69, %70 : vector<4x256xf32>
    %cst_32 = arith.constant 0.000000e+00 : f32
    %72 = vector.broadcast %cst_32 : f32 to vector<4x17xf32>
    %73 = vector.extract_strided_slice %71 {offsets = [0, 0], sizes = [4, 239], strides = [1, 1]} : vector<4x256xf32> to vector<4x239xf32>
    %74 = tpu.concatenate %72, %73 in 1 : vector<4x17xf32>, vector<4x239xf32> -> vector<4x256xf32>
    %cst_33 = arith.constant 0.000000e+00 : f32
    %75 = vector.shape_cast %36 : vector<1x256xi1> to vector<1x256xi1>
    %76 = vector.broadcast %75 : vector<1x256xi1> to vector<4x256xi1>
    %77 = vector.broadcast %cst_33 : f32 to vector<4x256xf32>
    %78 = arith.select %76, %74, %77 : vector<4x256xi1>, vector<4x256xf32>
    %cst_34 = arith.constant 0.000000e+00 : f32
    %79 = vector.broadcast %cst_34 : f32 to vector<4x16xf32>
    %80 = vector.extract_strided_slice %71 {offsets = [0, 0], sizes = [4, 240], strides = [1, 1]} : vector<4x256xf32> to vector<4x240xf32>
    %81 = tpu.concatenate %79, %80 in 1 : vector<4x16xf32>, vector<4x240xf32> -> vector<4x256xf32>
    %cst_35 = arith.constant 0.000000e+00 : f32
    %82 = vector.broadcast %cst_35 : f32 to vector<4x15xf32>
    %83 = vector.extract_strided_slice %71 {offsets = [0, 0], sizes = [4, 241], strides = [1, 1]} : vector<4x256xf32> to vector<4x241xf32>
    %84 = tpu.concatenate %82, %83 in 1 : vector<4x15xf32>, vector<4x241xf32> -> vector<4x256xf32>
    %cst_36 = arith.constant 0.000000e+00 : f32
    %85 = vector.shape_cast %45 : vector<1x256xi1> to vector<1x256xi1>
    %86 = vector.broadcast %85 : vector<1x256xi1> to vector<4x256xi1>
    %87 = vector.broadcast %cst_36 : f32 to vector<4x256xf32>
    %88 = arith.select %86, %84, %87 : vector<4x256xi1>, vector<4x256xf32>
    %cst_37 = arith.constant 0.000000e+00 : f32
    %89 = vector.broadcast %cst_37 : f32 to vector<4x1xf32>
    %90 = vector.extract_strided_slice %71 {offsets = [0, 0], sizes = [4, 255], strides = [1, 1]} : vector<4x256xf32> to vector<4x255xf32>
    %91 = tpu.concatenate %89, %90 in 1 : vector<4x1xf32>, vector<4x255xf32> -> vector<4x256xf32>
    %cst_38 = arith.constant 0.000000e+00 : f32
    %92 = vector.shape_cast %36 : vector<1x256xi1> to vector<1x256xi1>
    %93 = vector.broadcast %92 : vector<1x256xi1> to vector<4x256xi1>
    %94 = vector.broadcast %cst_38 : f32 to vector<4x256xf32>
    %95 = arith.select %93, %91, %94 : vector<4x256xi1>, vector<4x256xf32>
    %cst_39 = arith.constant 0.000000e+00 : f32
    %96 = vector.broadcast %cst_39 : f32 to vector<4x1xf32>
    %97 = vector.extract_strided_slice %71 {offsets = [0, 1], sizes = [4, 255], strides = [1, 1]} : vector<4x256xf32> to vector<4x255xf32>
    %98 = tpu.concatenate %97, %96 in 1 : vector<4x255xf32>, vector<4x1xf32> -> vector<4x256xf32>
    %cst_40 = arith.constant 0.000000e+00 : f32
    %99 = vector.shape_cast %45 : vector<1x256xi1> to vector<1x256xi1>
    %100 = vector.broadcast %99 : vector<1x256xi1> to vector<4x256xi1>
    %101 = vector.broadcast %cst_40 : f32 to vector<4x256xf32>
    %102 = arith.select %100, %98, %101 : vector<4x256xi1>, vector<4x256xf32>
    %cst_41 = arith.constant 0.000000e+00 : f32
    %103 = vector.broadcast %cst_41 : f32 to vector<4x15xf32>
    %104 = vector.extract_strided_slice %71 {offsets = [0, 15], sizes = [4, 241], strides = [1, 1]} : vector<4x256xf32> to vector<4x241xf32>
    %105 = tpu.concatenate %104, %103 in 1 : vector<4x241xf32>, vector<4x15xf32> -> vector<4x256xf32>
    %cst_42 = arith.constant 0.000000e+00 : f32
    %106 = vector.shape_cast %36 : vector<1x256xi1> to vector<1x256xi1>
    %107 = vector.broadcast %106 : vector<1x256xi1> to vector<4x256xi1>
    %108 = vector.broadcast %cst_42 : f32 to vector<4x256xf32>
    %109 = arith.select %107, %105, %108 : vector<4x256xi1>, vector<4x256xf32>
    %cst_43 = arith.constant 0.000000e+00 : f32
    %110 = vector.broadcast %cst_43 : f32 to vector<4x16xf32>
    %111 = vector.extract_strided_slice %71 {offsets = [0, 16], sizes = [4, 240], strides = [1, 1]} : vector<4x256xf32> to vector<4x240xf32>
    %112 = tpu.concatenate %111, %110 in 1 : vector<4x240xf32>, vector<4x16xf32> -> vector<4x256xf32>
    %cst_44 = arith.constant 0.000000e+00 : f32
    %113 = vector.broadcast %cst_44 : f32 to vector<4x17xf32>
    %114 = vector.extract_strided_slice %71 {offsets = [0, 17], sizes = [4, 239], strides = [1, 1]} : vector<4x256xf32> to vector<4x239xf32>
    %115 = tpu.concatenate %114, %113 in 1 : vector<4x239xf32>, vector<4x17xf32> -> vector<4x256xf32>
    %cst_45 = arith.constant 0.000000e+00 : f32
    %116 = vector.shape_cast %45 : vector<1x256xi1> to vector<1x256xi1>
    %117 = vector.broadcast %116 : vector<1x256xi1> to vector<4x256xi1>
    %118 = vector.broadcast %cst_45 : f32 to vector<4x256xf32>
    %119 = arith.select %117, %115, %118 : vector<4x256xi1>, vector<4x256xf32>
    %120 = tpu.concatenate %78, %81, %88, %95, %71, %102, %109, %112, %119 in 0 : vector<4x256xf32>, vector<4x256xf32>, vector<4x256xf32>, vector<4x256xf32>, vector<4x256xf32>, vector<4x256xf32>, vector<4x256xf32>, vector<4x256xf32>, vector<4x256xf32> -> vector<36x256xf32>
    %c0_46 = arith.constant 0 : index
    %c0_47 = arith.constant 0 : index
    %121 = vector.load %arg6[%c0_46, %c0_47] : memref<8x36xf32, #tpu.memory_space<vmem>>, vector<8x36xf32>
    %cst_48 = arith.constant dense<0.000000e+00> : vector<8x256xf32>
    %122 = tpu.matmul %121, %120, %cst_48 {dimension_numbers = #tpu.dot_dimension_numbers<[1], [0], [0], [1], [0, 0, 1, 1], [], []>} : vector<8x36xf32>, vector<36x256xf32>, vector<8x256xf32> -> vector<8x256xf32>
    %c0_49 = arith.constant 0 : index
    %c0_50 = arith.constant 0 : index
    %123 = vector.load %arg7[%c0_49, %c0_50] : memref<8x1xf32, #tpu.memory_space<vmem>>, vector<8x1xf32>
    %124 = vector.broadcast %123 : vector<8x1xf32> to vector<8x256xf32>
    %125 = arith.addf %122, %124 : vector<8x256xf32>
    %cst_51 = arith.constant 0.000000e+00 : f32
    %126 = vector.broadcast %cst_51 : f32 to vector<8x256xf32>
    %127 = arith.maximumf %125, %126 : vector<8x256xf32>
    %c0_52 = arith.constant 0 : index
    %c8 = arith.constant 8 : index
    %c0_53 = arith.constant 0 : index
    %128 = vector.load %arg14[%c0_52, %c8, %c0_53] : memref<1x32x256xf32, #tpu.memory_space<vmem>>, vector<1x8x256xf32>
    %129 = vector.shape_cast %128 : vector<1x8x256xf32> to vector<8x256xf32>
    %130 = vector.shape_cast %127 : vector<8x256xf32> to vector<1x8x256xf32>
    tpu.vector_store %arg14[%c0_52, %c8, %c0_53], %130 {strides = array<i32>} : memref<1x32x256xf32, #tpu.memory_space<vmem>>, vector<1x8x256xf32>,
    %c0_54 = arith.constant 0 : index
    %c0_55 = arith.constant 0 : index
    %131 = vector.load %arg8[%c0_54, %c0_55] : memref<4x4xf32, #tpu.memory_space<vmem>>, vector<4x4xf32>
    %cst_56 = arith.constant dense<0.000000e+00> : vector<4x256xf32>
    %132 = tpu.matmul %131, %1, %cst_56 {dimension_numbers = #tpu.dot_dimension_numbers<[1], [0], [0], [1], [0, 0, 1, 1], [], []>} : vector<4x4xf32>, vector<4x256xf32>, vector<4x256xf32> -> vector<4x256xf32>
    %c0_57 = arith.constant 0 : index
    %c0_58 = arith.constant 0 : index
    %133 = vector.load %arg9[%c0_57, %c0_58] : memref<4x1xf32, #tpu.memory_space<vmem>>, vector<4x1xf32>
    %134 = vector.broadcast %133 : vector<4x1xf32> to vector<4x256xf32>
    %135 = arith.addf %132, %134 : vector<4x256xf32>
    %cst_59 = arith.constant 0.000000e+00 : f32
    %136 = vector.broadcast %cst_59 : f32 to vector<4x256xf32>
    %137 = arith.maximumf %135, %136 : vector<4x256xf32>
    %cst_60 = arith.constant 0.000000e+00 : f32
    %138 = vector.broadcast %cst_60 : f32 to vector<4x34xf32>
    %139 = vector.extract_strided_slice %137 {offsets = [0, 0], sizes = [4, 222], strides = [1, 1]} : vector<4x256xf32> to vector<4x222xf32>
    %140 = tpu.concatenate %138, %139 in 1 : vector<4x34xf32>, vector<4x222xf32> -> vector<4x256xf32>
    %cst_61 = arith.constant 0.000000e+00 : f32
    %141 = vector.shape_cast %27 : vector<1x256xi1> to vector<1x256xi1>
    %142 = vector.broadcast %141 : vector<1x256xi1> to vector<4x256xi1>
    %143 = vector.broadcast %cst_61 : f32 to vector<4x256xf32>
    %144 = arith.select %142, %140, %143 : vector<4x256xi1>, vector<4x256xf32>
    %cst_62 = arith.constant 0.000000e+00 : f32
    %145 = vector.broadcast %cst_62 : f32 to vector<4x33xf32>
    %146 = vector.extract_strided_slice %137 {offsets = [0, 0], sizes = [4, 223], strides = [1, 1]} : vector<4x256xf32> to vector<4x223xf32>
    %147 = tpu.concatenate %145, %146 in 1 : vector<4x33xf32>, vector<4x223xf32> -> vector<4x256xf32>
    %cst_63 = arith.constant 0.000000e+00 : f32
    %148 = vector.shape_cast %36 : vector<1x256xi1> to vector<1x256xi1>
    %149 = vector.broadcast %148 : vector<1x256xi1> to vector<4x256xi1>
    %150 = vector.broadcast %cst_63 : f32 to vector<4x256xf32>
    %151 = arith.select %149, %147, %150 : vector<4x256xi1>, vector<4x256xf32>
    %cst_64 = arith.constant 0.000000e+00 : f32
    %152 = vector.broadcast %cst_64 : f32 to vector<4x32xf32>
    %153 = vector.extract_strided_slice %137 {offsets = [0, 0], sizes = [4, 224], strides = [1, 1]} : vector<4x256xf32> to vector<4x224xf32>
    %154 = tpu.concatenate %152, %153 in 1 : vector<4x32xf32>, vector<4x224xf32> -> vector<4x256xf32>
    %cst_65 = arith.constant 0.000000e+00 : f32
    %155 = vector.broadcast %cst_65 : f32 to vector<4x31xf32>
    %156 = vector.extract_strided_slice %137 {offsets = [0, 0], sizes = [4, 225], strides = [1, 1]} : vector<4x256xf32> to vector<4x225xf32>
    %157 = tpu.concatenate %155, %156 in 1 : vector<4x31xf32>, vector<4x225xf32> -> vector<4x256xf32>
    %cst_66 = arith.constant 0.000000e+00 : f32
    %158 = vector.shape_cast %45 : vector<1x256xi1> to vector<1x256xi1>
    %159 = vector.broadcast %158 : vector<1x256xi1> to vector<4x256xi1>
    %160 = vector.broadcast %cst_66 : f32 to vector<4x256xf32>
    %161 = arith.select %159, %157, %160 : vector<4x256xi1>, vector<4x256xf32>
    %cst_67 = arith.constant 0.000000e+00 : f32
    %162 = vector.broadcast %cst_67 : f32 to vector<4x30xf32>
    %163 = vector.extract_strided_slice %137 {offsets = [0, 0], sizes = [4, 226], strides = [1, 1]} : vector<4x256xf32> to vector<4x226xf32>
    %164 = tpu.concatenate %162, %163 in 1 : vector<4x30xf32>, vector<4x226xf32> -> vector<4x256xf32>
    %cst_68 = arith.constant 0.000000e+00 : f32
    %165 = vector.shape_cast %54 : vector<1x256xi1> to vector<1x256xi1>
    %166 = vector.broadcast %165 : vector<1x256xi1> to vector<4x256xi1>
    %167 = vector.broadcast %cst_68 : f32 to vector<4x256xf32>
    %168 = arith.select %166, %164, %167 : vector<4x256xi1>, vector<4x256xf32>
    %cst_69 = arith.constant 0.000000e+00 : f32
    %169 = vector.broadcast %cst_69 : f32 to vector<4x18xf32>
    %170 = vector.extract_strided_slice %137 {offsets = [0, 0], sizes = [4, 238], strides = [1, 1]} : vector<4x256xf32> to vector<4x238xf32>
    %171 = tpu.concatenate %169, %170 in 1 : vector<4x18xf32>, vector<4x238xf32> -> vector<4x256xf32>
    %cst_70 = arith.constant 0.000000e+00 : f32
    %172 = vector.shape_cast %27 : vector<1x256xi1> to vector<1x256xi1>
    %173 = vector.broadcast %172 : vector<1x256xi1> to vector<4x256xi1>
    %174 = vector.broadcast %cst_70 : f32 to vector<4x256xf32>
    %175 = arith.select %173, %171, %174 : vector<4x256xi1>, vector<4x256xf32>
    %cst_71 = arith.constant 0.000000e+00 : f32
    %176 = vector.broadcast %cst_71 : f32 to vector<4x17xf32>
    %177 = vector.extract_strided_slice %137 {offsets = [0, 0], sizes = [4, 239], strides = [1, 1]} : vector<4x256xf32> to vector<4x239xf32>
    %178 = tpu.concatenate %176, %177 in 1 : vector<4x17xf32>, vector<4x239xf32> -> vector<4x256xf32>
    %cst_72 = arith.constant 0.000000e+00 : f32
    %179 = vector.shape_cast %36 : vector<1x256xi1> to vector<1x256xi1>
    %180 = vector.broadcast %179 : vector<1x256xi1> to vector<4x256xi1>
    %181 = vector.broadcast %cst_72 : f32 to vector<4x256xf32>
    %182 = arith.select %180, %178, %181 : vector<4x256xi1>, vector<4x256xf32>
    %cst_73 = arith.constant 0.000000e+00 : f32
    %183 = vector.broadcast %cst_73 : f32 to vector<4x16xf32>
    %184 = vector.extract_strided_slice %137 {offsets = [0, 0], sizes = [4, 240], strides = [1, 1]} : vector<4x256xf32> to vector<4x240xf32>
    %185 = tpu.concatenate %183, %184 in 1 : vector<4x16xf32>, vector<4x240xf32> -> vector<4x256xf32>
    %cst_74 = arith.constant 0.000000e+00 : f32
    %186 = vector.broadcast %cst_74 : f32 to vector<4x15xf32>
    %187 = vector.extract_strided_slice %137 {offsets = [0, 0], sizes = [4, 241], strides = [1, 1]} : vector<4x256xf32> to vector<4x241xf32>
    %188 = tpu.concatenate %186, %187 in 1 : vector<4x15xf32>, vector<4x241xf32> -> vector<4x256xf32>
    %cst_75 = arith.constant 0.000000e+00 : f32
    %189 = vector.shape_cast %45 : vector<1x256xi1> to vector<1x256xi1>
    %190 = vector.broadcast %189 : vector<1x256xi1> to vector<4x256xi1>
    %191 = vector.broadcast %cst_75 : f32 to vector<4x256xf32>
    %192 = arith.select %190, %188, %191 : vector<4x256xi1>, vector<4x256xf32>
    %cst_76 = arith.constant 0.000000e+00 : f32
    %193 = vector.broadcast %cst_76 : f32 to vector<4x14xf32>
    %194 = vector.extract_strided_slice %137 {offsets = [0, 0], sizes = [4, 242], strides = [1, 1]} : vector<4x256xf32> to vector<4x242xf32>
    %195 = tpu.concatenate %193, %194 in 1 : vector<4x14xf32>, vector<4x242xf32> -> vector<4x256xf32>
    %cst_77 = arith.constant 0.000000e+00 : f32
    %196 = vector.shape_cast %54 : vector<1x256xi1> to vector<1x256xi1>
    %197 = vector.broadcast %196 : vector<1x256xi1> to vector<4x256xi1>
    %198 = vector.broadcast %cst_77 : f32 to vector<4x256xf32>
    %199 = arith.select %197, %195, %198 : vector<4x256xi1>, vector<4x256xf32>
    %cst_78 = arith.constant 0.000000e+00 : f32
    %200 = vector.broadcast %cst_78 : f32 to vector<4x2xf32>
    %201 = vector.extract_strided_slice %137 {offsets = [0, 0], sizes = [4, 254], strides = [1, 1]} : vector<4x256xf32> to vector<4x254xf32>
    %202 = tpu.concatenate %200, %201 in 1 : vector<4x2xf32>, vector<4x254xf32> -> vector<4x256xf32>
    %cst_79 = arith.constant 0.000000e+00 : f32
    %203 = vector.shape_cast %27 : vector<1x256xi1> to vector<1x256xi1>
    %204 = vector.broadcast %203 : vector<1x256xi1> to vector<4x256xi1>
    %205 = vector.broadcast %cst_79 : f32 to vector<4x256xf32>
    %206 = arith.select %204, %202, %205 : vector<4x256xi1>, vector<4x256xf32>
    %cst_80 = arith.constant 0.000000e+00 : f32
    %207 = vector.broadcast %cst_80 : f32 to vector<4x1xf32>
    %208 = vector.extract_strided_slice %137 {offsets = [0, 0], sizes = [4, 255], strides = [1, 1]} : vector<4x256xf32> to vector<4x255xf32>
    %209 = tpu.concatenate %207, %208 in 1 : vector<4x1xf32>, vector<4x255xf32> -> vector<4x256xf32>
    %cst_81 = arith.constant 0.000000e+00 : f32
    %210 = vector.shape_cast %36 : vector<1x256xi1> to vector<1x256xi1>
    %211 = vector.broadcast %210 : vector<1x256xi1> to vector<4x256xi1>
    %212 = vector.broadcast %cst_81 : f32 to vector<4x256xf32>
    %213 = arith.select %211, %209, %212 : vector<4x256xi1>, vector<4x256xf32>
    %cst_82 = arith.constant 0.000000e+00 : f32
    %214 = vector.broadcast %cst_82 : f32 to vector<4x1xf32>
    %215 = vector.extract_strided_slice %137 {offsets = [0, 1], sizes = [4, 255], strides = [1, 1]} : vector<4x256xf32> to vector<4x255xf32>
    %216 = tpu.concatenate %215, %214 in 1 : vector<4x255xf32>, vector<4x1xf32> -> vector<4x256xf32>
    %cst_83 = arith.constant 0.000000e+00 : f32
    %217 = vector.shape_cast %45 : vector<1x256xi1> to vector<1x256xi1>
    %218 = vector.broadcast %217 : vector<1x256xi1> to vector<4x256xi1>
    %219 = vector.broadcast %cst_83 : f32 to vector<4x256xf32>
    %220 = arith.select %218, %216, %219 : vector<4x256xi1>, vector<4x256xf32>
    %cst_84 = arith.constant 0.000000e+00 : f32
    %221 = vector.broadcast %cst_84 : f32 to vector<4x2xf32>
    %222 = vector.extract_strided_slice %137 {offsets = [0, 2], sizes = [4, 254], strides = [1, 1]} : vector<4x256xf32> to vector<4x254xf32>
    %223 = tpu.concatenate %222, %221 in 1 : vector<4x254xf32>, vector<4x2xf32> -> vector<4x256xf32>
    %cst_85 = arith.constant 0.000000e+00 : f32
    %224 = vector.shape_cast %54 : vector<1x256xi1> to vector<1x256xi1>
    %225 = vector.broadcast %224 : vector<1x256xi1> to vector<4x256xi1>
    %226 = vector.broadcast %cst_85 : f32 to vector<4x256xf32>
    %227 = arith.select %225, %223, %226 : vector<4x256xi1>, vector<4x256xf32>
    %cst_86 = arith.constant 0.000000e+00 : f32
    %228 = vector.broadcast %cst_86 : f32 to vector<4x14xf32>
    %229 = vector.extract_strided_slice %137 {offsets = [0, 14], sizes = [4, 242], strides = [1, 1]} : vector<4x256xf32> to vector<4x242xf32>
    %230 = tpu.concatenate %229, %228 in 1 : vector<4x242xf32>, vector<4x14xf32> -> vector<4x256xf32>
    %cst_87 = arith.constant 0.000000e+00 : f32
    %231 = vector.shape_cast %27 : vector<1x256xi1> to vector<1x256xi1>
    %232 = vector.broadcast %231 : vector<1x256xi1> to vector<4x256xi1>
    %233 = vector.broadcast %cst_87 : f32 to vector<4x256xf32>
    %234 = arith.select %232, %230, %233 : vector<4x256xi1>, vector<4x256xf32>
    %cst_88 = arith.constant 0.000000e+00 : f32
    %235 = vector.broadcast %cst_88 : f32 to vector<4x15xf32>
    %236 = vector.extract_strided_slice %137 {offsets = [0, 15], sizes = [4, 241], strides = [1, 1]} : vector<4x256xf32> to vector<4x241xf32>
    %237 = tpu.concatenate %236, %235 in 1 : vector<4x241xf32>, vector<4x15xf32> -> vector<4x256xf32>
    %cst_89 = arith.constant 0.000000e+00 : f32
    %238 = vector.shape_cast %36 : vector<1x256xi1> to vector<1x256xi1>
    %239 = vector.broadcast %238 : vector<1x256xi1> to vector<4x256xi1>
    %240 = vector.broadcast %cst_89 : f32 to vector<4x256xf32>
    %241 = arith.select %239, %237, %240 : vector<4x256xi1>, vector<4x256xf32>
    %cst_90 = arith.constant 0.000000e+00 : f32
    %242 = vector.broadcast %cst_90 : f32 to vector<4x16xf32>
    %243 = vector.extract_strided_slice %137 {offsets = [0, 16], sizes = [4, 240], strides = [1, 1]} : vector<4x256xf32> to vector<4x240xf32>
    %244 = tpu.concatenate %243, %242 in 1 : vector<4x240xf32>, vector<4x16xf32> -> vector<4x256xf32>
    %cst_91 = arith.constant 0.000000e+00 : f32
    %245 = vector.broadcast %cst_91 : f32 to vector<4x17xf32>
    %246 = vector.extract_strided_slice %137 {offsets = [0, 17], sizes = [4, 239], strides = [1, 1]} : vector<4x256xf32> to vector<4x239xf32>
    %247 = tpu.concatenate %246, %245 in 1 : vector<4x239xf32>, vector<4x17xf32> -> vector<4x256xf32>
    %cst_92 = arith.constant 0.000000e+00 : f32
    %248 = vector.shape_cast %45 : vector<1x256xi1> to vector<1x256xi1>
    %249 = vector.broadcast %248 : vector<1x256xi1> to vector<4x256xi1>
    %250 = vector.broadcast %cst_92 : f32 to vector<4x256xf32>
    %251 = arith.select %249, %247, %250 : vector<4x256xi1>, vector<4x256xf32>
    %cst_93 = arith.constant 0.000000e+00 : f32
    %252 = vector.broadcast %cst_93 : f32 to vector<4x18xf32>
    %253 = vector.extract_strided_slice %137 {offsets = [0, 18], sizes = [4, 238], strides = [1, 1]} : vector<4x256xf32> to vector<4x238xf32>
    %254 = tpu.concatenate %253, %252 in 1 : vector<4x238xf32>, vector<4x18xf32> -> vector<4x256xf32>
    %cst_94 = arith.constant 0.000000e+00 : f32
    %255 = vector.shape_cast %54 : vector<1x256xi1> to vector<1x256xi1>
    %256 = vector.broadcast %255 : vector<1x256xi1> to vector<4x256xi1>
    %257 = vector.broadcast %cst_94 : f32 to vector<4x256xf32>
    %258 = arith.select %256, %254, %257 : vector<4x256xi1>, vector<4x256xf32>
    %cst_95 = arith.constant 0.000000e+00 : f32
    %259 = vector.broadcast %cst_95 : f32 to vector<4x30xf32>
    %260 = vector.extract_strided_slice %137 {offsets = [0, 30], sizes = [4, 226], strides = [1, 1]} : vector<4x256xf32> to vector<4x226xf32>
    %261 = tpu.concatenate %260, %259 in 1 : vector<4x226xf32>, vector<4x30xf32> -> vector<4x256xf32>
    %cst_96 = arith.constant 0.000000e+00 : f32
    %262 = vector.shape_cast %27 : vector<1x256xi1> to vector<1x256xi1>
    %263 = vector.broadcast %262 : vector<1x256xi1> to vector<4x256xi1>
    %264 = vector.broadcast %cst_96 : f32 to vector<4x256xf32>
    %265 = arith.select %263, %261, %264 : vector<4x256xi1>, vector<4x256xf32>
    %cst_97 = arith.constant 0.000000e+00 : f32
    %266 = vector.broadcast %cst_97 : f32 to vector<4x31xf32>
    %267 = vector.extract_strided_slice %137 {offsets = [0, 31], sizes = [4, 225], strides = [1, 1]} : vector<4x256xf32> to vector<4x225xf32>
    %268 = tpu.concatenate %267, %266 in 1 : vector<4x225xf32>, vector<4x31xf32> -> vector<4x256xf32>
    %cst_98 = arith.constant 0.000000e+00 : f32
    %269 = vector.shape_cast %36 : vector<1x256xi1> to vector<1x256xi1>
    %270 = vector.broadcast %269 : vector<1x256xi1> to vector<4x256xi1>
    %271 = vector.broadcast %cst_98 : f32 to vector<4x256xf32>
    %272 = arith.select %270, %268, %271 : vector<4x256xi1>, vector<4x256xf32>
    %cst_99 = arith.constant 0.000000e+00 : f32
    %273 = vector.broadcast %cst_99 : f32 to vector<4x32xf32>
    %274 = vector.extract_strided_slice %137 {offsets = [0, 32], sizes = [4, 224], strides = [1, 1]} : vector<4x256xf32> to vector<4x224xf32>
    %275 = tpu.concatenate %274, %273 in 1 : vector<4x224xf32>, vector<4x32xf32> -> vector<4x256xf32>
    %cst_100 = arith.constant 0.000000e+00 : f32
    %276 = vector.broadcast %cst_100 : f32 to vector<4x33xf32>
    %277 = vector.extract_strided_slice %137 {offsets = [0, 33], sizes = [4, 223], strides = [1, 1]} : vector<4x256xf32> to vector<4x223xf32>
    %278 = tpu.concatenate %277, %276 in 1 : vector<4x223xf32>, vector<4x33xf32> -> vector<4x256xf32>
    %cst_101 = arith.constant 0.000000e+00 : f32
    %279 = vector.shape_cast %45 : vector<1x256xi1> to vector<1x256xi1>
    %280 = vector.broadcast %279 : vector<1x256xi1> to vector<4x256xi1>
    %281 = vector.broadcast %cst_101 : f32 to vector<4x256xf32>
    %282 = arith.select %280, %278, %281 : vector<4x256xi1>, vector<4x256xf32>
    %cst_102 = arith.constant 0.000000e+00 : f32
    %283 = vector.broadcast %cst_102 : f32 to vector<4x34xf32>
    %284 = vector.extract_strided_slice %137 {offsets = [0, 34], sizes = [4, 222], strides = [1, 1]} : vector<4x256xf32> to vector<4x222xf32>
    %285 = tpu.concatenate %284, %283 in 1 : vector<4x222xf32>, vector<4x34xf32> -> vector<4x256xf32>
    %cst_103 = arith.constant 0.000000e+00 : f32
    %286 = vector.shape_cast %54 : vector<1x256xi1> to vector<1x256xi1>
    %287 = vector.broadcast %286 : vector<1x256xi1> to vector<4x256xi1>
    %288 = vector.broadcast %cst_103 : f32 to vector<4x256xf32>
    %289 = arith.select %287, %285, %288 : vector<4x256xi1>, vector<4x256xf32>
    %290 = tpu.concatenate %144, %151, %154, %161, %168, %175, %182, %185, %192, %199, %206, %213, %137, %220, %227, %234 in 0 : vector<4x256xf32>, vector<4x256xf32>, vector<4x256xf32>, vector<4x256xf32>, vector<4x256xf32>, vector<4x256xf32>, vector<4x256xf32>, vector<4x256xf32>, vector<4x256xf32>, vector<4x256xf32>, vector<4x256xf32>, vector<4x256xf32>, vector<4x256xf32>, vector<4x256xf32>, vector<4x256xf32>, vector<4x256xf32> -> vector<64x256xf32>
    %291 = tpu.concatenate %241, %244, %251, %258, %265, %272, %275, %282, %289 in 0 : vector<4x256xf32>, vector<4x256xf32>, vector<4x256xf32>, vector<4x256xf32>, vector<4x256xf32>, vector<4x256xf32>, vector<4x256xf32>, vector<4x256xf32>, vector<4x256xf32> -> vector<36x256xf32>
    %292 = tpu.concatenate %290, %291 in 0 : vector<64x256xf32>, vector<36x256xf32> -> vector<100x256xf32>
    %c0_104 = arith.constant 0 : index
    %c0_105 = arith.constant 0 : index
    %293 = vector.load %arg10[%c0_104, %c0_105] : memref<8x100xf32, #tpu.memory_space<vmem>>, vector<8x100xf32>
    %cst_106 = arith.constant dense<0.000000e+00> : vector<8x256xf32>
    %294 = tpu.matmul %293, %292, %cst_106 {dimension_numbers = #tpu.dot_dimension_numbers<[1], [0], [0], [1], [0, 0, 1, 1], [], []>} : vector<8x100xf32>, vector<100x256xf32>, vector<8x256xf32> -> vector<8x256xf32>
    %c0_107 = arith.constant 0 : index
    %c0_108 = arith.constant 0 : index
    %295 = vector.load %arg11[%c0_107, %c0_108] : memref<8x1xf32, #tpu.memory_space<vmem>>, vector<8x1xf32>
    %296 = vector.broadcast %295 : vector<8x1xf32> to vector<8x256xf32>
    %297 = arith.addf %294, %296 : vector<8x256xf32>
    %cst_109 = arith.constant 0.000000e+00 : f32
    %298 = vector.broadcast %cst_109 : f32 to vector<8x256xf32>
    %299 = arith.maximumf %297, %298 : vector<8x256xf32>
    %c0_110 = arith.constant 0 : index
    %c16 = arith.constant 16 : index
    %c0_111 = arith.constant 0 : index
    %300 = vector.load %arg14[%c0_110, %c16, %c0_111] : memref<1x32x256xf32, #tpu.memory_space<vmem>>, vector<1x8x256xf32>
    %301 = vector.shape_cast %300 : vector<1x8x256xf32> to vector<8x256xf32>
    %302 = vector.shape_cast %299 : vector<8x256xf32> to vector<1x8x256xf32>
    tpu.vector_store %arg14[%c0_110, %c16, %c0_111], %302 {strides = array<i32>} : memref<1x32x256xf32, #tpu.memory_space<vmem>>, vector<1x8x256xf32>,
    %cst_112 = arith.constant 0xFF800000 : f32
    %303 = vector.broadcast %cst_112 : f32 to vector<4x17xf32>
    %304 = vector.extract_strided_slice %1 {offsets = [0, 0], sizes = [4, 239], strides = [1, 1]} : vector<4x256xf32> to vector<4x239xf32>
    %305 = tpu.concatenate %303, %304 in 1 : vector<4x17xf32>, vector<4x239xf32> -> vector<4x256xf32>
    %cst_113 = arith.constant 0xFF800000 : f32
    %306 = vector.shape_cast %36 : vector<1x256xi1> to vector<1x256xi1>
    %307 = vector.broadcast %306 : vector<1x256xi1> to vector<4x256xi1>
    %308 = vector.broadcast %cst_113 : f32 to vector<4x256xf32>
    %309 = arith.select %307, %305, %308 : vector<4x256xi1>, vector<4x256xf32>
    %310 = arith.maximumf %1, %309 : vector<4x256xf32>
    %cst_114 = arith.constant 0xFF800000 : f32
    %311 = vector.broadcast %cst_114 : f32 to vector<4x16xf32>
    %312 = vector.extract_strided_slice %1 {offsets = [0, 0], sizes = [4, 240], strides = [1, 1]} : vector<4x256xf32> to vector<4x240xf32>
    %313 = tpu.concatenate %311, %312 in 1 : vector<4x16xf32>, vector<4x240xf32> -> vector<4x256xf32>
    %314 = arith.maximumf %310, %313 : vector<4x256xf32>
    %cst_115 = arith.constant 0xFF800000 : f32
    %315 = vector.broadcast %cst_115 : f32 to vector<4x15xf32>
    %316 = vector.extract_strided_slice %1 {offsets = [0, 0], sizes = [4, 241], strides = [1, 1]} : vector<4x256xf32> to vector<4x241xf32>
    %317 = tpu.concatenate %315, %316 in 1 : vector<4x15xf32>, vector<4x241xf32> -> vector<4x256xf32>
    %cst_116 = arith.constant 0xFF800000 : f32
    %318 = vector.shape_cast %45 : vector<1x256xi1> to vector<1x256xi1>
    %319 = vector.broadcast %318 : vector<1x256xi1> to vector<4x256xi1>
    %320 = vector.broadcast %cst_116 : f32 to vector<4x256xf32>
    %321 = arith.select %319, %317, %320 : vector<4x256xi1>, vector<4x256xf32>
    %322 = arith.maximumf %314, %321 : vector<4x256xf32>
    %cst_117 = arith.constant 0xFF800000 : f32
    %323 = vector.broadcast %cst_117 : f32 to vector<4x1xf32>
    %324 = vector.extract_strided_slice %1 {offsets = [0, 0], sizes = [4, 255], strides = [1, 1]} : vector<4x256xf32> to vector<4x255xf32>
    %325 = tpu.concatenate %323, %324 in 1 : vector<4x1xf32>, vector<4x255xf32> -> vector<4x256xf32>
    %cst_118 = arith.constant 0xFF800000 : f32
    %326 = vector.shape_cast %36 : vector<1x256xi1> to vector<1x256xi1>
    %327 = vector.broadcast %326 : vector<1x256xi1> to vector<4x256xi1>
    %328 = vector.broadcast %cst_118 : f32 to vector<4x256xf32>
    %329 = arith.select %327, %325, %328 : vector<4x256xi1>, vector<4x256xf32>
    %330 = arith.maximumf %322, %329 : vector<4x256xf32>
    %cst_119 = arith.constant 0xFF800000 : f32
    %331 = vector.broadcast %cst_119 : f32 to vector<4x1xf32>
    %332 = vector.extract_strided_slice %1 {offsets = [0, 1], sizes = [4, 255], strides = [1, 1]} : vector<4x256xf32> to vector<4x255xf32>
    %333 = tpu.concatenate %332, %331 in 1 : vector<4x255xf32>, vector<4x1xf32> -> vector<4x256xf32>
    %cst_120 = arith.constant 0xFF800000 : f32
    %334 = vector.shape_cast %45 : vector<1x256xi1> to vector<1x256xi1>
    %335 = vector.broadcast %334 : vector<1x256xi1> to vector<4x256xi1>
    %336 = vector.broadcast %cst_120 : f32 to vector<4x256xf32>
    %337 = arith.select %335, %333, %336 : vector<4x256xi1>, vector<4x256xf32>
    %338 = arith.maximumf %330, %337 : vector<4x256xf32>
    %cst_121 = arith.constant 0xFF800000 : f32
    %339 = vector.broadcast %cst_121 : f32 to vector<4x15xf32>
    %340 = vector.extract_strided_slice %1 {offsets = [0, 15], sizes = [4, 241], strides = [1, 1]} : vector<4x256xf32> to vector<4x241xf32>
    %341 = tpu.concatenate %340, %339 in 1 : vector<4x241xf32>, vector<4x15xf32> -> vector<4x256xf32>
    %cst_122 = arith.constant 0xFF800000 : f32
    %342 = vector.shape_cast %36 : vector<1x256xi1> to vector<1x256xi1>
    %343 = vector.broadcast %342 : vector<1x256xi1> to vector<4x256xi1>
    %344 = vector.broadcast %cst_122 : f32 to vector<4x256xf32>
    %345 = arith.select %343, %341, %344 : vector<4x256xi1>, vector<4x256xf32>
    %346 = arith.maximumf %338, %345 : vector<4x256xf32>
    %cst_123 = arith.constant 0xFF800000 : f32
    %347 = vector.broadcast %cst_123 : f32 to vector<4x16xf32>
    %348 = vector.extract_strided_slice %1 {offsets = [0, 16], sizes = [4, 240], strides = [1, 1]} : vector<4x256xf32> to vector<4x240xf32>
    %349 = tpu.concatenate %348, %347 in 1 : vector<4x240xf32>, vector<4x16xf32> -> vector<4x256xf32>
    %350 = arith.maximumf %346, %349 : vector<4x256xf32>
    %cst_124 = arith.constant 0xFF800000 : f32
    %351 = vector.broadcast %cst_124 : f32 to vector<4x17xf32>
    %352 = vector.extract_strided_slice %1 {offsets = [0, 17], sizes = [4, 239], strides = [1, 1]} : vector<4x256xf32> to vector<4x239xf32>
    %353 = tpu.concatenate %352, %351 in 1 : vector<4x239xf32>, vector<4x17xf32> -> vector<4x256xf32>
    %cst_125 = arith.constant 0xFF800000 : f32
    %354 = vector.shape_cast %45 : vector<1x256xi1> to vector<1x256xi1>
    %355 = vector.broadcast %354 : vector<1x256xi1> to vector<4x256xi1>
    %356 = vector.broadcast %cst_125 : f32 to vector<4x256xf32>
    %357 = arith.select %355, %353, %356 : vector<4x256xi1>, vector<4x256xf32>
    %358 = arith.maximumf %350, %357 : vector<4x256xf32>
    %c0_126 = arith.constant 0 : index
    %c0_127 = arith.constant 0 : index
    %359 = vector.load %arg12[%c0_126, %c0_127] : memref<8x4xf32, #tpu.memory_space<vmem>>, vector<8x4xf32>
    %cst_128 = arith.constant dense<0.000000e+00> : vector<8x256xf32>
    %360 = tpu.matmul %359, %358, %cst_128 {dimension_numbers = #tpu.dot_dimension_numbers<[1], [0], [0], [1], [0, 0, 1, 1], [], []>} : vector<8x4xf32>, vector<4x256xf32>, vector<8x256xf32> -> vector<8x256xf32>
    %c0_129 = arith.constant 0 : index
    %c0_130 = arith.constant 0 : index
    %361 = vector.load %arg13[%c0_129, %c0_130] : memref<8x1xf32, #tpu.memory_space<vmem>>, vector<8x1xf32>
    %362 = vector.broadcast %361 : vector<8x1xf32> to vector<8x256xf32>
    %363 = arith.addf %360, %362 : vector<8x256xf32>
    %cst_131 = arith.constant 0.000000e+00 : f32
    %364 = vector.broadcast %cst_131 : f32 to vector<8x256xf32>
    %365 = arith.maximumf %363, %364 : vector<8x256xf32>
    %c0_132 = arith.constant 0 : index
    %c24 = arith.constant 24 : index
    %c0_133 = arith.constant 0 : index
    %366 = vector.load %arg14[%c0_132, %c24, %c0_133] : memref<1x32x256xf32, #tpu.memory_space<vmem>>, vector<1x8x256xf32>
    %367 = vector.shape_cast %366 : vector<1x8x256xf32> to vector<8x256xf32>
    %368 = vector.shape_cast %365 : vector<8x256xf32> to vector<1x8x256xf32>
    tpu.vector_store %arg14[%c0_132, %c24, %c0_133], %368 {strides = array<i32>} : memref<1x32x256xf32, #tpu.memory_space<vmem>>, vector<1x8x256xf32>,
    return
  }
  func.func @transform_0(%arg0: i32) -> (i32, i32, i32) {
    %c0_i32 = arith.constant 0 : i32
    %c0_i32_0 = arith.constant 0 : i32
    %c0_i32_1 = arith.constant 0 : i32
    return %arg0, %c0_i32, %c0_i32_0 : i32, i32, i32
  }
  func.func @transform_1(%arg0: i32) -> (i32, i32) {
    %c0_i32 = arith.constant 0 : i32
    %c0_i32_0 = arith.constant 0 : i32
    %c0_i32_1 = arith.constant 0 : i32
    return %c0_i32, %c0_i32_0 : i32, i32
  }
  func.func @transform_2(%arg0: i32) -> (i32, i32) {
    %c0_i32 = arith.constant 0 : i32
    %c0_i32_0 = arith.constant 0 : i32
    %c0_i32_1 = arith.constant 0 : i32
    return %c0_i32, %c0_i32_0 : i32, i32
  }
  func.func @transform_3(%arg0: i32) -> (i32, i32) {
    %c0_i32 = arith.constant 0 : i32
    %c0_i32_0 = arith.constant 0 : i32
    %c0_i32_1 = arith.constant 0 : i32
    return %c0_i32, %c0_i32_0 : i32, i32
  }
  func.func @transform_4(%arg0: i32) -> (i32, i32) {
    %c0_i32 = arith.constant 0 : i32
    %c0_i32_0 = arith.constant 0 : i32
    %c0_i32_1 = arith.constant 0 : i32
    return %c0_i32, %c0_i32_0 : i32, i32
  }
  func.func @transform_5(%arg0: i32) -> (i32, i32) {
    %c0_i32 = arith.constant 0 : i32
    %c0_i32_0 = arith.constant 0 : i32
    %c0_i32_1 = arith.constant 0 : i32
    return %c0_i32, %c0_i32_0 : i32, i32
  }
  func.func @transform_6(%arg0: i32) -> (i32, i32) {
    %c0_i32 = arith.constant 0 : i32
    %c0_i32_0 = arith.constant 0 : i32
    %c0_i32_1 = arith.constant 0 : i32
    return %c0_i32, %c0_i32_0 : i32, i32
  }
  func.func @transform_7(%arg0: i32) -> (i32, i32) {
    %c0_i32 = arith.constant 0 : i32
    %c0_i32_0 = arith.constant 0 : i32
    %c0_i32_1 = arith.constant 0 : i32
    return %c0_i32, %c0_i32_0 : i32, i32
  }
  func.func @transform_8(%arg0: i32) -> (i32, i32) {
    %c0_i32 = arith.constant 0 : i32
    %c0_i32_0 = arith.constant 0 : i32
    %c0_i32_1 = arith.constant 0 : i32
    return %c0_i32, %c0_i32_0 : i32, i32
  }
  func.func @transform_9(%arg0: i32) -> (i32, i32) {
    %c0_i32 = arith.constant 0 : i32
    %c0_i32_0 = arith.constant 0 : i32
    %c0_i32_1 = arith.constant 0 : i32
    return %c0_i32, %c0_i32_0 : i32, i32
  }
  func.func @transform_10(%arg0: i32) -> (i32, i32) {
    %c0_i32 = arith.constant 0 : i32
    %c0_i32_0 = arith.constant 0 : i32
    %c0_i32_1 = arith.constant 0 : i32
    return %c0_i32, %c0_i32_0 : i32, i32
  }
  func.func @transform_11(%arg0: i32) -> (i32, i32) {
    %c0_i32 = arith.constant 0 : i32
    %c0_i32_0 = arith.constant 0 : i32
    %c0_i32_1 = arith.constant 0 : i32
    return %c0_i32, %c0_i32_0 : i32, i32
  }
  func.func @transform_12(%arg0: i32) -> (i32, i32) {
    %c0_i32 = arith.constant 0 : i32
    %c0_i32_0 = arith.constant 0 : i32
    %c0_i32_1 = arith.constant 0 : i32
    return %c0_i32, %c0_i32_0 : i32, i32
  }
  func.func @transform_13(%arg0: i32) -> (i32, i32, i32) {
    %c0_i32 = arith.constant 0 : i32
    %c0_i32_0 = arith.constant 0 : i32
    %c0_i32_1 = arith.constant 0 : i32
    return %arg0, %c0_i32, %c0_i32_0 : i32, i32, i32
  }
}

</mosaic_0001>

<llo_original>
// kernel: tpu_custom_call.1
$region0: #{tpu_custom_call.1}
  #allocation0 [shape = 'u32[]', space=smem, size = 0x4, offset = 0x4, fixed_abs, tag = 'smem constant byte address 0x4 - core index']
  #allocation1 [shape = 'u32[144,128]{1,0:T(1,128)}', space=vmem, size = 0x12000, scoped, tag = 'internal scratch']
  %s0 = inlined_call_operand.vmem [shape: f32[2,4,256], index: 0, kind: input, shape index: {}]
  %s1 = inlined_call_operand.vmem [shape: f32[8,4], index: 1, kind: input, shape index: {}]
  %s2 = inlined_call_operand.vmem [shape: f32[8,1], index: 2, kind: input, shape index: {}]
  %s3 = inlined_call_operand.vmem [shape: f32[4,4], index: 3, kind: input, shape index: {}]
  %s4 = inlined_call_operand.vmem [shape: f32[4,1], index: 4, kind: input, shape index: {}]
  %s5 = inlined_call_operand.vmem [shape: f32[8,36], index: 5, kind: input, shape index: {}]
  %s6 = inlined_call_operand.vmem [shape: f32[8,1], index: 6, kind: input, shape index: {}]
  %s7 = inlined_call_operand.vmem [shape: f32[4,4], index: 7, kind: input, shape index: {}]
  %s8 = inlined_call_operand.vmem [shape: f32[4,1], index: 8, kind: input, shape index: {}]
  %s9 = inlined_call_operand.vmem [shape: f32[8,100], index: 9, kind: input, shape index: {}]
  %s10 = inlined_call_operand.vmem [shape: f32[8,1], index: 10, kind: input, shape index: {}]
  %s11 = inlined_call_operand.vmem [shape: f32[8,4], index: 11, kind: input, shape index: {}]
  %s12 = inlined_call_operand.vmem [shape: f32[8,1], index: 12, kind: input, shape index: {}]
  %s13 = inlined_call_operand.hbm [shape: f32[2,32,256], index: 13, kind: output, shape index: {}]
  %s14 = sld [smem:[#allocation0]]
  $region85: #{tpu_custom_call.1} parent=0
    _
  %s16 = ssub.s32 1, %s14
  %s17 = scalar_select 0, %s16, %s14
  $region1: #{tpu_custom_call.1} parent=0
    #allocation2 [shape = 'u8[65536]{0}', space=vmem, size = 0x10000, scoped, tag = 'output window, operand 0']
    #allocation3 [shape = 's32[2]{0}', space=sflag, size = 0x8, scoped, tag = 'scoped memory for tpu_custom_call.1']
    %18 = vsyncpa [#allocation3], 0
    %s19 = scalar_lea.sflag [#allocation3], 1
    %20 = vsyncpa %s19, 0
    loop: start=0, step=1, limit=4
    $region2: #{tpu_custom_call.1} parent=1 // loop_pre_header
      _
    $region3: #{tpu_custom_call.1} parent=1 // loop_header
      %s22 = sphi 0, %s26
      %p23 = scmp.ge.s32.totalorder %s22, 4
      %s32 = sphi 0, %s34
      %s35 = sphi 0, %s32
      %s36 = sphi 0, %s35
      %s52 = sphi 0, %s36
      %s56 = sphi 0, %s56
      %s58 = sphi 0, %s56
      %s59 = sphi 0, %s58
      %s73 = sphi 0, %s59
      %s77 = sphi 0, %s77
      %s79 = sphi 0, %s77
      %s80 = sphi 0, %s79
      %s94 = sphi 0, %s80
      %s98 = sphi 0, %s98
      %s100 = sphi 0, %s98
      %s101 = sphi 0, %s100
      %s115 = sphi 0, %s101
      %s119 = sphi 0, %s119
      %s121 = sphi 0, %s119
      %s122 = sphi 0, %s121
      %s136 = sphi 0, %s122
      %s140 = sphi 0, %s140
      %s142 = sphi 0, %s140
      %s143 = sphi 0, %s142
      %s157 = sphi 0, %s143
      %s161 = sphi 0, %s161
      %s163 = sphi 0, %s161
      %s164 = sphi 0, %s163
      %s178 = sphi 0, %s164
      %s182 = sphi 0, %s182
      %s184 = sphi 0, %s182
      %s185 = sphi 0, %s184
      %s199 = sphi 0, %s185
      %s203 = sphi 0, %s203
      %s205 = sphi 0, %s203
      %s206 = sphi 0, %s205
      %s220 = sphi 0, %s206
      %s224 = sphi 0, %s224
      %s226 = sphi 0, %s224
      %s227 = sphi 0, %s226
      %s241 = sphi 0, %s227
      %s245 = sphi 0, %s245
      %s247 = sphi 0, %s245
      %s248 = sphi 0, %s247
      %s262 = sphi 0, %s248
      %s266 = sphi 0, %s266
      %s268 = sphi 0, %s266
      %s269 = sphi 0, %s268
      %s283 = sphi 0, %s269
      %s287 = sphi 0, %s287
      %s289 = sphi 0, %s287
      %s290 = sphi 0, %s289
      %s304 = sphi 0, %s290
      %s310 = sphi 0, %s312
      %s313 = sphi 0, %s310
      %s314 = sphi 0, %s313
      %s330 = sphi 0, %s314
    $region4: #{tpu_custom_call.1} parent=1 // loop_header_branch
      %25 = sbr.rel (%p23) target = $region8
    $region5: #{tpu_custom_call.1} parent=1 // loop_body
      %s27 = ssub.s32 %s22, 1
      %s28 = ssub.s32 %s22, 2
      %s29 = sadd.s32 %s22, 1
      %s30 = ssub.s32 %s22, %s29
      %p31 = scmp.eq.s32.totalorder %s30, 0
      %s33 = sadd.s32 %s32, 1
      %s34 = scalar_select %p31, %s32, %s33
      %p37 = pneg %p31
      %p38 = scmp.eq.s32.totalorder %s22, 1
      %p39 = por %p37, %p38
      %p40 = scmp.ne.s32.totalorder %s32, %s35
      %p41 = scmp.eq.s32.totalorder %s22, 0
      %p42 = por %p40, %p41
      %p43 = scmp.ne.s32.totalorder %s32, %s35
      %p44 = scmp.eq.s32.totalorder %s27, 1
      %p45 = por %p43, %p44
      %p46 = scmp.ne.s32.totalorder %s35, %s36
      %p47 = scmp.eq.s32.totalorder %s27, 0
      %p48 = por %p46, %p47
      %p49 = scmp.ne.s32.totalorder %s35, %s36
      %p50 = scmp.eq.s32.totalorder %s28, 1
      %p51 = por %p49, %p50
      %p53 = scmp.ne.s32.totalorder %s36, %s52
      %p54 = scmp.eq.s32.totalorder %s28, 0
      %p55 = por %p53, %p54
      %s57 = sadd.s32 %s56, 1
      %p60 = scmp.eq.s32.totalorder %s22, 1
      %p61 = scmp.ne.s32.totalorder %s56, %s58
      %p62 = scmp.eq.s32.totalorder %s22, 0
      %p63 = por %p61, %p62
      %p64 = scmp.ne.s32.totalorder %s56, %s58
      %p65 = scmp.eq.s32.totalorder %s27, 1
      %p66 = por %p64, %p65
      %p67 = scmp.ne.s32.totalorder %s58, %s59
      %p68 = scmp.eq.s32.totalorder %s27, 0
      %p69 = por %p67, %p68
      %p70 = scmp.ne.s32.totalorder %s58, %s59
      %p71 = scmp.eq.s32.totalorder %s28, 1
      %p72 = por %p70, %p71
      %p74 = scmp.ne.s32.totalorder %s59, %s73
      %p75 = scmp.eq.s32.totalorder %s28, 0
      %p76 = por %p74, %p75
      %s78 = sadd.s32 %s77, 1
      %p81 = scmp.eq.s32.totalorder %s22, 1
      %p82 = scmp.ne.s32.totalorder %s77, %s79
      %p83 = scmp.eq.s32.totalorder %s22, 0
      %p84 = por %p82, %p83
      %p85 = scmp.ne.s32.totalorder %s77, %s79
      %p86 = scmp.eq.s32.totalorder %s27, 1
      %p87 = por %p85, %p86
      %p88 = scmp.ne.s32.totalorder %s79, %s80
      %p89 = scmp.eq.s32.totalorder %s27, 0
      %p90 = por %p88, %p89
      %p91 = scmp.ne.s32.totalorder %s79, %s80
      %p92 = scmp.eq.s32.totalorder %s28, 1
      %p93 = por %p91, %p92
      %p95 = scmp.ne.s32.totalorder %s80, %s94
      %p96 = scmp.eq.s32.totalorder %s28, 0
      %p97 = por %p95, %p96
      %s99 = sadd.s32 %s98, 1
      %p102 = scmp.eq.s32.totalorder %s22, 1
      %p103 = scmp.ne.s32.totalorder %s98, %s100
      %p104 = scmp.eq.s32.totalorder %s22, 0
      %p105 = por %p103, %p104
      %p106 = scmp.ne.s32.totalorder %s98, %s100
      %p107 = scmp.eq.s32.totalorder %s27, 1
      %p108 = por %p106, %p107
      %p109 = scmp.ne.s32.totalorder %s100, %s101
      %p110 = scmp.eq.s32.totalorder %s27, 0
      %p111 = por %p109, %p110
      %p112 = scmp.ne.s32.totalorder %s100, %s101
      %p113 = scmp.eq.s32.totalorder %s28, 1
      %p114 = por %p112, %p113
      %p116 = scmp.ne.s32.totalorder %s101, %s115
      %p117 = scmp.eq.s32.totalorder %s28, 0
      %p118 = por %p116, %p117
      %s120 = sadd.s32 %s119, 1
      %p123 = scmp.eq.s32.totalorder %s22, 1
      %p124 = scmp.ne.s32.totalorder %s119, %s121
      %p125 = scmp.eq.s32.totalorder %s22, 0
      %p126 = por %p124, %p125
      %p127 = scmp.ne.s32.totalorder %s119, %s121
      %p128 = scmp.eq.s32.totalorder %s27, 1
      %p129 = por %p127, %p128
      %p130 = scmp.ne.s32.totalorder %s121, %s122
      %p131 = scmp.eq.s32.totalorder %s27, 0
      %p132 = por %p130, %p131
      %p133 = scmp.ne.s32.totalorder %s121, %s122
      %p134 = scmp.eq.s32.totalorder %s28, 1
      %p135 = por %p133, %p134
      %p137 = scmp.ne.s32.totalorder %s122, %s136
      %p138 = scmp.eq.s32.totalorder %s28, 0
      %p139 = por %p137, %p138
      %s141 = sadd.s32 %s140, 1
      %p144 = scmp.eq.s32.totalorder %s22, 1
      %p145 = scmp.ne.s32.totalorder %s140, %s142
      %p146 = scmp.eq.s32.totalorder %s22, 0
      %p147 = por %p145, %p146
      %p148 = scmp.ne.s32.totalorder %s140, %s142
      %p149 = scmp.eq.s32.totalorder %s27, 1
      %p150 = por %p148, %p149
      %p151 = scmp.ne.s32.totalorder %s142, %s143
      %p152 = scmp.eq.s32.totalorder %s27, 0
      %p153 = por %p151, %p152
      %p154 = scmp.ne.s32.totalorder %s142, %s143
      %p155 = scmp.eq.s32.totalorder %s28, 1
      %p156 = por %p154, %p155
      %p158 = scmp.ne.s32.totalorder %s143, %s157
      %p159 = scmp.eq.s32.totalorder %s28, 0
      %p160 = por %p158, %p159
      %s162 = sadd.s32 %s161, 1
      %p165 = scmp.eq.s32.totalorder %s22, 1
      %p166 = scmp.ne.s32.totalorder %s161, %s163
      %p167 = scmp.eq.s32.totalorder %s22, 0
      %p168 = por %p166, %p167
      %p169 = scmp.ne.s32.totalorder %s161, %s163
      %p170 = scmp.eq.s32.totalorder %s27, 1
      %p171 = por %p169, %p170
      %p172 = scmp.ne.s32.totalorder %s163, %s164
      %p173 = scmp.eq.s32.totalorder %s27, 0
      %p174 = por %p172, %p173
      %p175 = scmp.ne.s32.totalorder %s163, %s164
      %p176 = scmp.eq.s32.totalorder %s28, 1
      %p177 = por %p175, %p176
      %p179 = scmp.ne.s32.totalorder %s164, %s178
      %p180 = scmp.eq.s32.totalorder %s28, 0
      %p181 = por %p179, %p180
      %s183 = sadd.s32 %s182, 1
      %p186 = scmp.eq.s32.totalorder %s22, 1
      %p187 = scmp.ne.s32.totalorder %s182, %s184
      %p188 = scmp.eq.s32.totalorder %s22, 0
      %p189 = por %p187, %p188
      %p190 = scmp.ne.s32.totalorder %s182, %s184
      %p191 = scmp.eq.s32.totalorder %s27, 1
      %p192 = por %p190, %p191
      %p193 = scmp.ne.s32.totalorder %s184, %s185
      %p194 = scmp.eq.s32.totalorder %s27, 0
      %p195 = por %p193, %p194
      %p196 = scmp.ne.s32.totalorder %s184, %s185
      %p197 = scmp.eq.s32.totalorder %s28, 1
      %p198 = por %p196, %p197
      %p200 = scmp.ne.s32.totalorder %s185, %s199
      %p201 = scmp.eq.s32.totalorder %s28, 0
      %p202 = por %p200, %p201
      %s204 = sadd.s32 %s203, 1
      %p207 = scmp.eq.s32.totalorder %s22, 1
      %p208 = scmp.ne.s32.totalorder %s203, %s205
      %p209 = scmp.eq.s32.totalorder %s22, 0
      %p210 = por %p208, %p209
      %p211 = scmp.ne.s32.totalorder %s203, %s205
      %p212 = scmp.eq.s32.totalorder %s27, 1
      %p213 = por %p211, %p212
      %p214 = scmp.ne.s32.totalorder %s205, %s206
      %p215 = scmp.eq.s32.totalorder %s27, 0
      %p216 = por %p214, %p215
      %p217 = scmp.ne.s32.totalorder %s205, %s206
      %p218 = scmp.eq.s32.totalorder %s28, 1
      %p219 = por %p217, %p218
      %p221 = scmp.ne.s32.totalorder %s206, %s220
      %p222 = scmp.eq.s32.totalorder %s28, 0
      %p223 = por %p221, %p222
      %s225 = sadd.s32 %s224, 1
      %p228 = scmp.eq.s32.totalorder %s22, 1
      %p229 = scmp.ne.s32.totalorder %s224, %s226
      %p230 = scmp.eq.s32.totalorder %s22, 0
      %p231 = por %p229, %p230
      %p232 = scmp.ne.s32.totalorder %s224, %s226
      %p233 = scmp.eq.s32.totalorder %s27, 1
      %p234 = por %p232, %p233
      %p235 = scmp.ne.s32.totalorder %s226, %s227
      %p236 = scmp.eq.s32.totalorder %s27, 0
      %p237 = por %p235, %p236
      %p238 = scmp.ne.s32.totalorder %s226, %s227
      %p239 = scmp.eq.s32.totalorder %s28, 1
      %p240 = por %p238, %p239
      %p242 = scmp.ne.s32.totalorder %s227, %s241
      %p243 = scmp.eq.s32.totalorder %s28, 0
      %p244 = por %p242, %p243
      %s246 = sadd.s32 %s245, 1
      %p249 = scmp.eq.s32.totalorder %s22, 1
      %p250 = scmp.ne.s32.totalorder %s245, %s247
      %p251 = scmp.eq.s32.totalorder %s22, 0
      %p252 = por %p250, %p251
      %p253 = scmp.ne.s32.totalorder %s245, %s247
      %p254 = scmp.eq.s32.totalorder %s27, 1
      %p255 = por %p253, %p254
      %p256 = scmp.ne.s32.totalorder %s247, %s248
      %p257 = scmp.eq.s32.totalorder %s27, 0
      %p258 = por %p256, %p257
      %p259 = scmp.ne.s32.totalorder %s247, %s248
      %p260 = scmp.eq.s32.totalorder %s28, 1
      %p261 = por %p259, %p260
      %p263 = scmp.ne.s32.totalorder %s248, %s262
      %p264 = scmp.eq.s32.totalorder %s28, 0
      %p265 = por %p263, %p264
      %s267 = sadd.s32 %s266, 1
      %p270 = scmp.eq.s32.totalorder %s22, 1
      %p271 = scmp.ne.s32.totalorder %s266, %s268
      %p272 = scmp.eq.s32.totalorder %s22, 0
      %p273 = por %p271, %p272
      %p274 = scmp.ne.s32.totalorder %s266, %s268
      %p275 = scmp.eq.s32.totalorder %s27, 1
      %p276 = por %p274, %p275
      %p277 = scmp.ne.s32.totalorder %s268, %s269
      %p278 = scmp.eq.s32.totalorder %s27, 0
      %p279 = por %p277, %p278
      %p280 = scmp.ne.s32.totalorder %s268, %s269
      %p281 = scmp.eq.s32.totalorder %s28, 1
      %p282 = por %p280, %p281
      %p284 = scmp.ne.s32.totalorder %s269, %s283
      %p285 = scmp.eq.s32.totalorder %s28, 0
      %p286 = por %p284, %p285
      %s288 = sadd.s32 %s287, 1
      %p291 = scmp.eq.s32.totalorder %s22, 1
      %p292 = scmp.ne.s32.totalorder %s287, %s289
      %p293 = scmp.eq.s32.totalorder %s22, 0
      %p294 = por %p292, %p293
      %p295 = scmp.ne.s32.totalorder %s287, %s289
      %p296 = scmp.eq.s32.totalorder %s27, 1
      %p297 = por %p295, %p296
      %p298 = scmp.ne.s32.totalorder %s289, %s290
      %p299 = scmp.eq.s32.totalorder %s27, 0
      %p300 = por %p298, %p299
      %p301 = scmp.ne.s32.totalorder %s289, %s290
      %p302 = scmp.eq.s32.totalorder %s28, 1
      %p303 = por %p301, %p302
      %p305 = scmp.ne.s32.totalorder %s290, %s304
      %p306 = scmp.eq.s32.totalorder %s28, 0
      %p307 = por %p305, %p306
      %s308 = ssub.s32 %s22, %s29
      %p309 = scmp.eq.s32.totalorder %s308, 0
      %s311 = sadd.s32 %s310, 1
      %s312 = scalar_select %p309, %s310, %s311
      %p315 = pneg %p309
      %p316 = scmp.eq.s32.totalorder %s22, 1
      %p317 = por %p315, %p316
      %p318 = scmp.ne.s32.totalorder %s310, %s313
      %p319 = scmp.eq.s32.totalorder %s22, 0
      %p320 = por %p318, %p319
      %p321 = scmp.ne.s32.totalorder %s310, %s313
      %p322 = scmp.eq.s32.totalorder %s27, 1
      %p323 = por %p321, %p322
      %p324 = scmp.ne.s32.totalorder %s313, %s314
      %p325 = scmp.eq.s32.totalorder %s27, 0
      %p326 = por %p324, %p325
      %p327 = scmp.ne.s32.totalorder %s313, %s314
      %p328 = scmp.eq.s32.totalorder %s28, 1
      %p329 = por %p327, %p328
      %p331 = scmp.ne.s32.totalorder %s314, %s330
      %p332 = scmp.eq.s32.totalorder %s28, 0
      %p333 = por %p331, %p332
      %p334 = scmp.le.s32.totalorder 1, %s22
      %p335 = scmp.lt.s32.totalorder %s22, 3
      %p336 = pnand %p334, %p335
      %p337 = pneg %p336
      // Predicated region
      $region9: #{tpu_custom_call.1} parent=5 // pred_check
        _
      $region10: #{tpu_custom_call.1} parent=5 // pred_check_branch
        %339 = sbr.rel (%p336) target = $region12
      $region11: #{tpu_custom_call.1} parent=5 // pred_region
        %s340 = ssub.s32 %s22, 1
        // Predicated region
        $region13: #{tpu_custom_call.1} parent=11 // pred_check
          %p341 = pneg %p69
        $region14: #{tpu_custom_call.1} parent=11 // pred_check_branch
          %343 = sbr.rel (%p341) target = $region16
        $region15: #{tpu_custom_call.1} parent=11 // pred_region
          _
        $region16: #{tpu_custom_call.1} parent=11 // pred_fallthru
          _
        // Predicated region
        $region17: #{tpu_custom_call.1} parent=11 // pred_check
          %p344 = pneg %p90
        $region18: #{tpu_custom_call.1} parent=11 // pred_check_branch
          %346 = sbr.rel (%p344) target = $region20
        $region19: #{tpu_custom_call.1} parent=11 // pred_region
          _
        $region20: #{tpu_custom_call.1} parent=11 // pred_fallthru
          _
        // Predicated region
        $region21: #{tpu_custom_call.1} parent=11 // pred_check
          %p347 = pneg %p111
        $region22: #{tpu_custom_call.1} parent=11 // pred_check_branch
          %349 = sbr.rel (%p347) target = $region24
        $region23: #{tpu_custom_call.1} parent=11 // pred_region
          _
        $region24: #{tpu_custom_call.1} parent=11 // pred_fallthru
          _
        // Predicated region
        $region25: #{tpu_custom_call.1} parent=11 // pred_check
          %p350 = pneg %p132
        $region26: #{tpu_custom_call.1} parent=11 // pred_check_branch
          %352 = sbr.rel (%p350) target = $region28
        $region27: #{tpu_custom_call.1} parent=11 // pred_region
          _
        $region28: #{tpu_custom_call.1} parent=11 // pred_fallthru
          _
        // Predicated region
        $region29: #{tpu_custom_call.1} parent=11 // pred_check
          %p353 = pneg %p153
        $region30: #{tpu_custom_call.1} parent=11 // pred_check_branch
          %355 = sbr.rel (%p353) target = $region32
        $region31: #{tpu_custom_call.1} parent=11 // pred_region
          _
        $region32: #{tpu_custom_call.1} parent=11 // pred_fallthru
          _
        // Predicated region
        $region33: #{tpu_custom_call.1} parent=11 // pred_check
          %p356 = pneg %p174
        $region34: #{tpu_custom_call.1} parent=11 // pred_check_branch
          %358 = sbr.rel (%p356) target = $region36
        $region35: #{tpu_custom_call.1} parent=11 // pred_region
          _
        $region36: #{tpu_custom_call.1} parent=11 // pred_fallthru
          _
        // Predicated region
        $region37: #{tpu_custom_call.1} parent=11 // pred_check
          %p359 = pneg %p195
        $region38: #{tpu_custom_call.1} parent=11 // pred_check_branch
          %361 = sbr.rel (%p359) target = $region40
        $region39: #{tpu_custom_call.1} parent=11 // pred_region
          _
        $region40: #{tpu_custom_call.1} parent=11 // pred_fallthru
          _
        // Predicated region
        $region41: #{tpu_custom_call.1} parent=11 // pred_check
          %p362 = pneg %p216
        $region42: #{tpu_custom_call.1} parent=11 // pred_check_branch
          %364 = sbr.rel (%p362) target = $region44
        $region43: #{tpu_custom_call.1} parent=11 // pred_region
          _
        $region44: #{tpu_custom_call.1} parent=11 // pred_fallthru
          _
        // Predicated region
        $region45: #{tpu_custom_call.1} parent=11 // pred_check
          %p365 = pneg %p237
        $region46: #{tpu_custom_call.1} parent=11 // pred_check_branch
          %367 = sbr.rel (%p365) target = $region48
        $region47: #{tpu_custom_call.1} parent=11 // pred_region
          _
        $region48: #{tpu_custom_call.1} parent=11 // pred_fallthru
          _
        // Predicated region
        $region49: #{tpu_custom_call.1} parent=11 // pred_check
          %p368 = pneg %p258
        $region50: #{tpu_custom_call.1} parent=11 // pred_check_branch
          %370 = sbr.rel (%p368) target = $region52
        $region51: #{tpu_custom_call.1} parent=11 // pred_region
          _
        $region52: #{tpu_custom_call.1} parent=11 // pred_fallthru
          _
        // Predicated region
        $region53: #{tpu_custom_call.1} parent=11 // pred_check
          %p371 = pneg %p279
        $region54: #{tpu_custom_call.1} parent=11 // pred_check_branch
          %373 = sbr.rel (%p371) target = $region56
        $region55: #{tpu_custom_call.1} parent=11 // pred_region
          _
        $region56: #{tpu_custom_call.1} parent=11 // pred_fallthru
          _
        // Predicated region
        $region57: #{tpu_custom_call.1} parent=11 // pred_check
          %p374 = pneg %p300
        $region58: #{tpu_custom_call.1} parent=11 // pred_check_branch
          %376 = sbr.rel (%p374) target = $region60
        $region59: #{tpu_custom_call.1} parent=11 // pred_region
          _
        $region60: #{tpu_custom_call.1} parent=11 // pred_fallthru
          _
      $region12: #{tpu_custom_call.1} parent=5 // pred_fallthru
        _
      %p377 = scmp.lt.s32.totalorder %s22, 2
      // Predicated region
      $region61: #{tpu_custom_call.1} parent=5 // pred_check
        %p378 = pneg %p377
      $region62: #{tpu_custom_call.1} parent=5 // pred_check_branch
        %380 = sbr.rel (%p378) target = $region64
      $region63: #{tpu_custom_call.1} parent=5 // pred_region
        // Predicated region
        $region65: #{tpu_custom_call.1} parent=63 // pred_check
          %p381 = pneg %p42
        $region66: #{tpu_custom_call.1} parent=63 // pred_check_branch
          %383 = sbr.rel (%p381) target = $region68
        $region67: #{tpu_custom_call.1} parent=63 // pred_region
          %p384 = scmp.lt.s32.totalorder %s22, 1
          %s385 = scalar_select %p384, %s22, 1
          %s386 = smul.addr %s385, 2
          %s387 = smul.addr %s386, 4
          %s388 = scalar_lea.vmem %s0, %s387
        $region68: #{tpu_custom_call.1} parent=63 // pred_fallthru
          _
      $region64: #{tpu_custom_call.1} parent=5 // pred_fallthru
        _
      %p389 = scmp.le.s32.totalorder 1, %s22
      %p390 = scmp.lt.s32.totalorder %s22, 3
      %p391 = pnand %p389, %p390
      %p392 = pneg %p391
      // Predicated region
      $region69: #{tpu_custom_call.1} parent=5 // pred_check
        _
      $region70: #{tpu_custom_call.1} parent=5 // pred_check_branch
        %394 = sbr.rel (%p391) target = $region72
      $region71: #{tpu_custom_call.1} parent=5 // pred_region
        %s395 = ssub.s32 %s22, 1
        %p396 = scmp.lt.s32.totalorder %s27, 1
        %s397 = scalar_select %p396, %s27, 1
        %s398 = smul.addr %s397, 2
        %s399 = smul.addr %s398, 4
        %s400 = scalar_lea.vmem %s0, %s399
        %p401 = pneg %p48
        %p402 = pneg %p45
        %p403 = pneg %p69
        %p404 = pneg %p66
        %p405 = pneg %p90
        %p406 = pneg %p87
        %p407 = pneg %p111
        %p408 = pneg %p108
        %p409 = pneg %p132
        %p410 = pneg %p129
        %p411 = pneg %p153
        %p412 = pneg %p150
        %p413 = pneg %p174
        %p414 = pneg %p171
        %p415 = pneg %p195
        %p416 = pneg %p192
        %p417 = pneg %p216
        %p418 = pneg %p213
        %p419 = pneg %p237
        %p420 = pneg %p234
        %p421 = pneg %p258
        %p422 = pneg %p255
        %p423 = pneg %p279
        %p424 = pneg %p276
        %p425 = pneg %p300
        %p426 = pneg %p297
        %p427 = pneg %p326
        %p428 = pneg %p323
        %s429 = sand.u32 %s313, 1
        %s430 = scalar_lea.sflag [#allocation3], %s429
        %s431 = sand.u32 %s313, 1
        %s432 = smul.addr %s431, 64
        %s433 = scalar_lea.vmem [#allocation2], %s432
        %p434 = scmp.lt.s32.totalorder %s27, 1
        %s435 = scalar_select %p434, %s27, 1
        %s436 = smul.addr %s435, 2
        %s437 = smul.addr %s436, 4
        %s438 = scalar_lea.vmem %s0, %s437
        %v439 = vld [vmem:[%s438] sm:$0xff]
        %v440 = vlaneseq
        %v441 = vand.u32 %v440, 127
        %v442 = vadd.s32 %v441, 128
        %vm443 = vcmp.lt.s32.totalorder %v441, 0
        %v444 = vsub.s32 0, %v441
        %v445 = vsel %vm443, %v444, %v441
        %v446 = vshrl.u32 %v445, 4
        %v447 = vand.u32 %v445, 15
        %v448 = vsub.s32 0, %v447
        %v449 = vsel %vm443, %v448, %v447
        %vm450 = vcmp.lt.s32.totalorder %v442, 0
        %v451 = vsub.s32 0, %v442
        %v452 = vsel %vm450, %v451, %v442
        %v453 = vshrl.u32 %v452, 4
        %v454 = vand.u32 %v452, 15
        %v455 = vsub.s32 0, %v454
        %v456 = vsel %vm450, %v455, %v454
        %vm457 = vcmp.ne.s32.totalorder %v449, 0
        %vm458 = vcmp.ne.s32.totalorder %v456, 0
        %vm459 = vcmp.lt.s32.totalorder %v449, 0
        %vm460 = vcmp.lt.s32.totalorder %v456, 0
        %vm461 = vmand %vm459, %vm457
        %vm462 = vmand %vm460, %vm458
        %v463 = vadd.s32 %v449, 16
        %v464 = vadd.s32 %v456, 16
        %v465 = vsel %vm461, %v463, %v449
        %v466 = vsel %vm462, %v464, %v456
        %v467 = vadd.s32 %v465, 4294967294
        %v468 = vadd.s32 %v466, 4294967294
        %vm469 = vcmp.ge.s32.totalorder %v467, 0
        %vm470 = vcmp.ge.s32.totalorder %v468, 0
        %vm471 = vcmp.lt.s32.totalorder %v467, 16
        %vm472 = vcmp.lt.s32.totalorder %v468, 16
        %vm473 = vmand %vm469, %vm471
        %vm474 = vmand %vm470, %vm472
        %v475 = vadd.s32 %v465, 4294967295
        %v476 = vadd.s32 %v466, 4294967295
        %vm477 = vcmp.ge.s32.totalorder %v475, 0
        %vm478 = vcmp.ge.s32.totalorder %v476, 0
        %vm479 = vcmp.lt.s32.totalorder %v475, 16
        %vm480 = vcmp.lt.s32.totalorder %v476, 16
        %vm481 = vmand %vm477, %vm479
        %vm482 = vmand %vm478, %vm480
        %v483 = vadd.s32 %v465, 1
        %v484 = vadd.s32 %v466, 1
        %vm485 = vcmp.ge.s32.totalorder %v483, 0
        %vm486 = vcmp.ge.s32.totalorder %v484, 0
        %vm487 = vcmp.lt.s32.totalorder %v483, 16
        %vm488 = vcmp.lt.s32.totalorder %v484, 16
        %vm489 = vmand %vm485, %vm487
        %vm490 = vmand %vm486, %vm488
        %v491 = vadd.s32 %v465, 2
        %v492 = vadd.s32 %v466, 2
        %vm493 = vcmp.ge.s32.totalorder %v491, 0
        %vm494 = vcmp.ge.s32.totalorder %v492, 0
        %vm495 = vcmp.lt.s32.totalorder %v491, 16
        %vm496 = vcmp.lt.s32.totalorder %v492, 16
        %vm497 = vmand %vm493, %vm495
        %vm498 = vmand %vm494, %vm496
        %v499 = vld [vmem:[%s1] sm:$0xff]
        %v500 = vld [vmem:[%s2] sm:$0xff]
        %502 = vset.pattern.permute.xlu0 0
        %503 = vperm.xlu0 %502, %v500
        %v504 = vpop.permute.xlu0 %503
        %v507 = vcombine.high %v439, %v439
        %vm508 = vcmask 31744
        %v510 = vsel %vm508, %v499, 0
        %vm512 = vcmask 1043456
        %v513 = vsel %vm512, %v439, 0
        %v515 = vsel %vm512, %v507, 0
        %517 = vmatprep.subr.mxu0 %v515
        %518 = vmatpush1.msra.mxu0 %v513
        %519 = vmatprep.subr.mxu0 0.0
        %520 = vmatpush1.msra.mxu0 0.0
        %521 = vmatprep.subr.mxu0 0.0
        %522 = vmatpush1.msra.mxu0 0.0
        %523 = vmatprep.subr.mxu0 0.0
        %524 = vmatpush1.msra.mxu0 0.0
        %525 = vmatprep.subr.mxu0 0.0
        %526 = vmatpush1.msra.mxu0 0.0
        %527 = vmatprep.subr.mxu0 0.0
        %528 = vmatpush1.msra.mxu0 0.0
        %529 = vmatprep.subr.mxu0 0.0
        %530 = vmatpush1.msra.mxu0 0.0
        %531 = vmatprep.subr.mxu0 0.0
        %532 = vmatpush1.msra.mxu0 0.0
        %533 = vmatprep.subr.mxu0 0.0
        %534 = vmatpush1.msra.mxu0 0.0
        %535 = vmatprep.subr.mxu0 0.0
        %536 = vmatpush1.msra.mxu0 0.0
        %537 = vmatprep.subr.mxu0 0.0
        %538 = vmatpush1.msra.mxu0 0.0
        %539 = vmatprep.subr.mxu0 0.0
        %540 = vmatpush1.msra.mxu0 0.0
        %541 = vmatprep.subr.mxu0 0.0
        %542 = vmatpush1.msra.mxu0 0.0
        %543 = vmatprep.subr.mxu0 0.0
        %544 = vmatpush1.msra.mxu0 0.0
        %545 = vmatprep.subr.mxu0 0.0
        %546 = vmatpush1.msra.mxu0 0.0
        %547 = vmatprep.subr.mxu0 0.0
        %548 = vmatpush1.msra.mxu0 0.0
        %549 = vmatprep.subr.mxu0 0.0
        %550 = vmatpush1.msra.mxu0 0.0
        %551 = vmatprep.subr.mxu0 0.0
        %552 = vmatpush1.msra.mxu0 0.0
        %553 = vmatprep.subr.mxu0 0.0
        %554 = vmatpush1.msra.mxu0 0.0
        %555 = vmatprep.subr.mxu0 0.0
        %556 = vmatpush1.msra.mxu0 0.0
        %557 = vmatprep.subr.mxu0 0.0
        %558 = vmatpush1.msra.mxu0 0.0
        %559 = vmatprep.subr.mxu0 0.0
        %560 = vmatpush1.msra.mxu0 0.0
        %561 = vmatprep.subr.mxu0 0.0
        %562 = vmatpush1.msra.mxu0 0.0
        %563 = vmatprep.subr.mxu0 0.0
        %564 = vmatpush1.msra.mxu0 0.0
        %565 = vmatprep.subr.mxu0 0.0
        %566 = vmatpush1.msra.mxu0 0.0
        %567 = vmatprep.subr.mxu0 0.0
        %568 = vmatpush1.msra.mxu0 0.0
        %569 = vmatprep.subr.mxu0 0.0
        %570 = vmatpush1.msra.mxu0 0.0
        %571 = vmatprep.subr.mxu0 0.0
        %572 = vmatpush1.msra.mxu0 0.0
        %573 = vmatprep.subr.mxu0 0.0
        %574 = vmatpush1.msra.mxu0 0.0
        %575 = vmatprep.subr.mxu0 0.0
        %576 = vmatpush1.msra.mxu0 0.0
        %577 = vmatprep.subr.mxu0 0.0
        %578 = vmatpush1.msra.mxu0 0.0
        %579 = vmatprep.subr.mxu0 0.0
        %580 = vmatpush1.msra.mxu0 0.0
        %581 = vmatprep.mubr.f32.mxu0 0.0
        %582 = vmatmul.mubr.f32.gmra.mrb[0].mxu0 %v510
        %v583 = vpop.f32.mrb[0].mxu0
        %v584 = vadd.f32 %v504, %v583
        %v585 = vpop.f32.mrb[0].mxu0
        %v586 = vadd.f32 %v504, %v585
        %587 = vdwg.mxu0
        %v588 = vmax.f32 %v584, 0.0
        %v589 = vmax.f32 %v586, 0.0
        %590 = vst [vmem:[%s433] sm:$0xff] %v588
        %591 = vst [vmem:[%s433 + $0x8] sm:$0xff] %v589
        %v592 = vld [vmem:[%s3] sm:$0xf]
        %v593 = vld [vmem:[%s4] sm:$0xf]
        %595 = vset.pattern.permute.xlu0 0
        %596 = vperm.xlu0 %595, %v593
        %v597 = vpop.permute.xlu0 %596
        %v600 = vsel %vm508, %v592, 0
        %602 = vmatprep.subr.mxu0 %v515
        %603 = vmatpush1.msra.mxu0 %v513
        %604 = vmatprep.subr.mxu0 0.0
        %605 = vmatpush1.msra.mxu0 0.0
        %606 = vmatprep.subr.mxu0 0.0
        %607 = vmatpush1.msra.mxu0 0.0
        %608 = vmatprep.subr.mxu0 0.0
        %609 = vmatpush1.msra.mxu0 0.0
        %610 = vmatprep.subr.mxu0 0.0
        %611 = vmatpush1.msra.mxu0 0.0
        %612 = vmatprep.subr.mxu0 0.0
        %613 = vmatpush1.msra.mxu0 0.0
        %614 = vmatprep.subr.mxu0 0.0
        %615 = vmatpush1.msra.mxu0 0.0
        %616 = vmatprep.subr.mxu0 0.0
        %617 = vmatpush1.msra.mxu0 0.0
        %618 = vmatprep.subr.mxu0 0.0
        %619 = vmatpush1.msra.mxu0 0.0
        %620 = vmatprep.subr.mxu0 0.0
        %621 = vmatpush1.msra.mxu0 0.0
        %622 = vmatprep.subr.mxu0 0.0
        %623 = vmatpush1.msra.mxu0 0.0
        %624 = vmatprep.subr.mxu0 0.0
        %625 = vmatpush1.msra.mxu0 0.0
        %626 = vmatprep.subr.mxu0 0.0
        %627 = vmatpush1.msra.mxu0 0.0
        %628 = vmatprep.subr.mxu0 0.0
        %629 = vmatpush1.msra.mxu0 0.0
        %630 = vmatprep.subr.mxu0 0.0
        %631 = vmatpush1.msra.mxu0 0.0
        %632 = vmatprep.subr.mxu0 0.0
        %633 = vmatpush1.msra.mxu0 0.0
        %634 = vmatprep.subr.mxu0 0.0
        %635 = vmatpush1.msra.mxu0 0.0
        %636 = vmatprep.subr.mxu0 0.0
        %637 = vmatpush1.msra.mxu0 0.0
        %638 = vmatprep.subr.mxu0 0.0
        %639 = vmatpush1.msra.mxu0 0.0
        %640 = vmatprep.subr.mxu0 0.0
        %641 = vmatpush1.msra.mxu0 0.0
        %642 = vmatprep.subr.mxu0 0.0
        %643 = vmatpush1.msra.mxu0 0.0
        %644 = vmatprep.subr.mxu0 0.0
        %645 = vmatpush1.msra.mxu0 0.0
        %646 = vmatprep.subr.mxu0 0.0
        %647 = vmatpush1.msra.mxu0 0.0
        %648 = vmatprep.subr.mxu0 0.0
        %649 = vmatpush1.msra.mxu0 0.0
        %650 = vmatprep.subr.mxu0 0.0
        %651 = vmatpush1.msra.mxu0 0.0
        %652 = vmatprep.subr.mxu0 0.0
        %653 = vmatpush1.msra.mxu0 0.0
        %654 = vmatprep.subr.mxu0 0.0
        %655 = vmatpush1.msra.mxu0 0.0
        %656 = vmatprep.subr.mxu0 0.0
        %657 = vmatpush1.msra.mxu0 0.0
        %658 = vmatprep.subr.mxu0 0.0
        %659 = vmatpush1.msra.mxu0 0.0
        %660 = vmatprep.subr.mxu0 0.0
        %661 = vmatpush1.msra.mxu0 0.0
        %662 = vmatprep.subr.mxu0 0.0
        %663 = vmatpush1.msra.mxu0 0.0
        %664 = vmatprep.subr.mxu0 0.0
        %665 = vmatpush1.msra.mxu0 0.0
        %666 = vmatprep.mubr.f32.mxu0 0.0
        %667 = vmatmul.mubr.f32.gmra.mrb[0].mxu0 %v600
        %v668 = vpop.f32.mrb[0].mxu0
        %v669 = vadd.f32 %v597, %v668
        %v670 = vpop.f32.mrb[0].mxu0
        %v671 = vadd.f32 %v597, %v670
        %672 = vdwg.mxu0
        %v673 = vmax.f32 %v669, 0.0
        %v674 = vmax.f32 %v671, 0.0
        %677 = vrot.lane.b32.xlu0 %v673, 17
        %v678 = vpop.permute.xlu0 %677
        %679 = vrot.lane.b32.xlu0 %v674, 17
        %v680 = vpop.permute.xlu0 %679
        %vm681 = vcmask 138240
        %v682 = vsel %vm681, %v678, %v680
        %v685 = vsel %vm681, 0.0, %v678
        %v686 = vsel %vm481, 1, 0
        %v687 = vsel %vm482, 1, 0
        %vm688 = vcmp.eq.s32.totalorder %v686, 1
        %vm689 = vcmp.eq.s32.totalorder %v687, 1
        %v690 = vsel %vm688, %v685, 0.0
        %v691 = vsel %vm689, %v682, 0.0
        %692 = vrot.lane.b32.xlu0 %v673, 16
        %v693 = vpop.permute.xlu0 %692
        %694 = vrot.lane.b32.xlu0 %v674, 16
        %v695 = vpop.permute.xlu0 %694
        %vm696 = vcmask 130048
        %v697 = vsel %vm696, %v693, %v695
        %v699 = vsel %vm696, 0.0, %v693
        %700 = vrot.lane.b32.xlu0 %v673, 15
        %v701 = vpop.permute.xlu0 %700
        %702 = vrot.lane.b32.xlu0 %v674, 15
        %v703 = vpop.permute.xlu0 %702
        %vm704 = vcmask 121856
        %v705 = vsel %vm704, %v701, %v703
        %v708 = vsel %vm704, 0.0, %v701
        %v709 = vsel %vm489, 1, 0
        %v710 = vsel %vm490, 1, 0
        %vm711 = vcmp.eq.s32.totalorder %v709, 1
        %vm712 = vcmp.eq.s32.totalorder %v710, 1
        %v713 = vsel %vm711, %v708, 0.0
        %v714 = vsel %vm712, %v705, 0.0
        %715 = vrot.lane.b32.xlu0 %v673, 1
        %v716 = vpop.permute.xlu0 %715
        %717 = vrot.lane.b32.xlu0 %v674, 1
        %v718 = vpop.permute.xlu0 %717
        %vm719 = vcmask 7168
        %v720 = vsel %vm719, %v716, %v718
        %v723 = vsel %vm719, 0.0, %v716
        %v724 = vsel %vm688, %v723, 0.0
        %v725 = vsel %vm689, %v720, 0.0
        %726 = vrot.lane.b32.xlu0 %v673, 127
        %v727 = vpop.permute.xlu0 %726
        %728 = vrot.lane.b32.xlu0 %v674, 127
        %v729 = vpop.permute.xlu0 %728
        %vm730 = vcmask 1039360
        %v731 = vsel %vm730, %v727, %v729
        %v734 = vsel %vm730, %v729, 0.0
        %v735 = vsel %vm711, %v731, 0.0
        %v736 = vsel %vm712, %v734, 0.0
        %737 = vrot.lane.b32.xlu0 %v673, 113
        %v738 = vpop.permute.xlu0 %737
        %739 = vrot.lane.b32.xlu0 %v674, 113
        %v740 = vpop.permute.xlu0 %739
        %vm741 = vcmask 924672
        %v742 = vsel %vm741, %v738, %v740
        %v745 = vsel %vm741, %v740, 0.0
        %v746 = vsel %vm688, %v742, 0.0
        %v747 = vsel %vm689, %v745, 0.0
        %748 = vrot.lane.b32.xlu0 %v673, 112
        %v749 = vpop.permute.xlu0 %748
        %750 = vrot.lane.b32.xlu0 %v674, 112
        %v751 = vpop.permute.xlu0 %750
        %vm752 = vcmask 916480
        %v753 = vsel %vm752, %v749, %v751
        %v755 = vsel %vm752, %v751, 0.0
        %756 = vrot.lane.b32.xlu0 %v673, 111
        %v757 = vpop.permute.xlu0 %756
        %758 = vrot.lane.b32.xlu0 %v674, 111
        %v759 = vpop.permute.xlu0 %758
        %vm760 = vcmask 908288
        %v761 = vsel %vm760, %v757, %v759
        %v764 = vsel %vm760, %v759, 0.0
        %v765 = vsel %vm711, %v761, 0.0
        %v766 = vsel %vm712, %v764, 0.0
        %v768 = vrot.slane %v699, 4
        %v769 = vrot.slane %v697, 4
        %v774 = vrot.slane %v724, 4
        %v775 = vrot.slane %v725, 4
        %v780 = vrot.slane %v735, 4
        %v781 = vrot.slane %v736, 4
        %v785 = vrot.slane %v753, 4
        %v786 = vrot.slane %v755, 4
        %v789 = vsel %vm512, %v690, %v768
        %v790 = vsel %vm512, %v691, %v769
        %v791 = vsel %vm512, %v713, %v774
        %v792 = vsel %vm512, %v714, %v775
        %v793 = vsel %vm512, %v673, %v780
        %v794 = vsel %vm512, %v674, %v781
        %v795 = vsel %vm512, %v746, %v785
        %v796 = vsel %vm512, %v747, %v786
        %v797 = vld [vmem:[%s5] sm:$0xff]
        %v798 = vld [vmem:[%s6] sm:$0xff]
        %800 = vset.pattern.permute.xlu0 0
        %801 = vperm.xlu0 %800, %v798
        %v802 = vpop.permute.xlu0 %801
        %vm804 = vcmask 293888
        %v806 = vsel %vm804, %v797, 0
        %v809 = vsel %vm512, %v765, 0
        %v812 = vsel %vm512, %v766, 0
        %814 = vmatprep.subr.mxu0 %v790
        %815 = vmatpush1.msra.mxu0 %v789
        %816 = vmatprep.subr.mxu0 %v792
        %817 = vmatpush1.msra.mxu0 %v791
        %818 = vmatprep.subr.mxu0 %v794
        %819 = vmatpush1.msra.mxu0 %v793
        %820 = vmatprep.subr.mxu0 %v796
        %821 = vmatpush1.msra.mxu0 %v795
        %822 = vmatprep.subr.mxu0 %v812
        %823 = vmatpush1.msra.mxu0 %v809
        %824 = vmatprep.subr.mxu0 0.0
        %825 = vmatpush1.msra.mxu0 0.0
        %826 = vmatprep.subr.mxu0 0.0
        %827 = vmatpush1.msra.mxu0 0.0
        %828 = vmatprep.subr.mxu0 0.0
        %829 = vmatpush1.msra.mxu0 0.0
        %830 = vmatprep.subr.mxu0 0.0
        %831 = vmatpush1.msra.mxu0 0.0
        %832 = vmatprep.subr.mxu0 0.0
        %833 = vmatpush1.msra.mxu0 0.0
        %834 = vmatprep.subr.mxu0 0.0
        %835 = vmatpush1.msra.mxu0 0.0
        %836 = vmatprep.subr.mxu0 0.0
        %837 = vmatpush1.msra.mxu0 0.0
        %838 = vmatprep.subr.mxu0 0.0
        %839 = vmatpush1.msra.mxu0 0.0
        %840 = vmatprep.subr.mxu0 0.0
        %841 = vmatpush1.msra.mxu0 0.0
        %842 = vmatprep.subr.mxu0 0.0
        %843 = vmatpush1.msra.mxu0 0.0
        %844 = vmatprep.subr.mxu0 0.0
        %845 = vmatpush1.msra.mxu0 0.0
        %846 = vmatprep.subr.mxu0 0.0
        %847 = vmatpush1.msra.mxu0 0.0
        %848 = vmatprep.subr.mxu0 0.0
        %849 = vmatpush1.msra.mxu0 0.0
        %850 = vmatprep.subr.mxu0 0.0
        %851 = vmatpush1.msra.mxu0 0.0
        %852 = vmatprep.subr.mxu0 0.0
        %853 = vmatpush1.msra.mxu0 0.0
        %854 = vmatprep.subr.mxu0 0.0
        %855 = vmatpush1.msra.mxu0 0.0
        %856 = vmatprep.subr.mxu0 0.0
        %857 = vmatpush1.msra.mxu0 0.0
        %858 = vmatprep.subr.mxu0 0.0
        %859 = vmatpush1.msra.mxu0 0.0
        %860 = vmatprep.subr.mxu0 0.0
        %861 = vmatpush1.msra.mxu0 0.0
        %862 = vmatprep.subr.mxu0 0.0
        %863 = vmatpush1.msra.mxu0 0.0
        %864 = vmatprep.subr.mxu0 0.0
        %865 = vmatpush1.msra.mxu0 0.0
        %866 = vmatprep.subr.mxu0 0.0
        %867 = vmatpush1.msra.mxu0 0.0
        %868 = vmatprep.subr.mxu0 0.0
        %869 = vmatpush1.msra.mxu0 0.0
        %870 = vmatprep.subr.mxu0 0.0
        %871 = vmatpush1.msra.mxu0 0.0
        %872 = vmatprep.subr.mxu0 0.0
        %873 = vmatpush1.msra.mxu0 0.0
        %874 = vmatprep.subr.mxu0 0.0
        %875 = vmatpush1.msra.mxu0 0.0
        %876 = vmatprep.subr.mxu0 0.0
        %877 = vmatpush1.msra.mxu0 0.0
        %878 = vmatprep.mubr.f32.mxu0 0.0
        %879 = vmatmul.mubr.f32.gmra.mrb[0].mxu0 %v806
        %v880 = vpop.f32.mrb[0].mxu0
        %v881 = vadd.f32 %v802, %v880
        %v882 = vpop.f32.mrb[0].mxu0
        %v883 = vadd.f32 %v802, %v882
        %884 = vdwg.mxu0
        %v885 = vmax.f32 %v881, 0.0
        %v886 = vmax.f32 %v883, 0.0
        %887 = vst [vmem:[%s433 + $0x10] sm:$0xff] %v885
        %888 = vst [vmem:[%s433 + $0x18] sm:$0xff] %v886
        %v889 = vld [vmem:[%s7] sm:$0xf]
        %v890 = vld [vmem:[%s8] sm:$0xf]
        %892 = vset.pattern.permute.xlu0 0
        %893 = vperm.xlu0 %892, %v890
        %v894 = vpop.permute.xlu0 %893
        %v897 = vsel %vm508, %v889, 0
        %899 = vmatprep.subr.mxu0 %v515
        %900 = vmatpush1.msra.mxu0 %v513
        %901 = vmatprep.subr.mxu0 0.0
        %902 = vmatpush1.msra.mxu0 0.0
        %903 = vmatprep.subr.mxu0 0.0
        %904 = vmatpush1.msra.mxu0 0.0
        %905 = vmatprep.subr.mxu0 0.0
        %906 = vmatpush1.msra.mxu0 0.0
        %907 = vmatprep.subr.mxu0 0.0
        %908 = vmatpush1.msra.mxu0 0.0
        %909 = vmatprep.subr.mxu0 0.0
        %910 = vmatpush1.msra.mxu0 0.0
        %911 = vmatprep.subr.mxu0 0.0
        %912 = vmatpush1.msra.mxu0 0.0
        %913 = vmatprep.subr.mxu0 0.0
        %914 = vmatpush1.msra.mxu0 0.0
        %915 = vmatprep.subr.mxu0 0.0
        %916 = vmatpush1.msra.mxu0 0.0
        %917 = vmatprep.subr.mxu0 0.0
        %918 = vmatpush1.msra.mxu0 0.0
        %919 = vmatprep.subr.mxu0 0.0
        %920 = vmatpush1.msra.mxu0 0.0
        %921 = vmatprep.subr.mxu0 0.0
        %922 = vmatpush1.msra.mxu0 0.0
        %923 = vmatprep.subr.mxu0 0.0
        %924 = vmatpush1.msra.mxu0 0.0
        %925 = vmatprep.subr.mxu0 0.0
        %926 = vmatpush1.msra.mxu0 0.0
        %927 = vmatprep.subr.mxu0 0.0
        %928 = vmatpush1.msra.mxu0 0.0
        %929 = vmatprep.subr.mxu0 0.0
        %930 = vmatpush1.msra.mxu0 0.0
        %931 = vmatprep.subr.mxu0 0.0
        %932 = vmatpush1.msra.mxu0 0.0
        %933 = vmatprep.subr.mxu0 0.0
        %934 = vmatpush1.msra.mxu0 0.0
        %935 = vmatprep.subr.mxu0 0.0
        %936 = vmatpush1.msra.mxu0 0.0
        %937 = vmatprep.subr.mxu0 0.0
        %938 = vmatpush1.msra.mxu0 0.0
        %939 = vmatprep.subr.mxu0 0.0
        %940 = vmatpush1.msra.mxu0 0.0
        %941 = vmatprep.subr.mxu0 0.0
        %942 = vmatpush1.msra.mxu0 0.0
        %943 = vmatprep.subr.mxu0 0.0
        %944 = vmatpush1.msra.mxu0 0.0
        %945 = vmatprep.subr.mxu0 0.0
        %946 = vmatpush1.msra.mxu0 0.0
        %947 = vmatprep.subr.mxu0 0.0
        %948 = vmatpush1.msra.mxu0 0.0
        %949 = vmatprep.subr.mxu0 0.0
        %950 = vmatpush1.msra.mxu0 0.0
        %951 = vmatprep.subr.mxu0 0.0
        %952 = vmatpush1.msra.mxu0 0.0
        %953 = vmatprep.subr.mxu0 0.0
        %954 = vmatpush1.msra.mxu0 0.0
        %955 = vmatprep.subr.mxu0 0.0
        %956 = vmatpush1.msra.mxu0 0.0
        %957 = vmatprep.subr.mxu0 0.0
        %958 = vmatpush1.msra.mxu0 0.0
        %959 = vmatprep.subr.mxu0 0.0
        %960 = vmatpush1.msra.mxu0 0.0
        %961 = vmatprep.subr.mxu0 0.0
        %962 = vmatpush1.msra.mxu0 0.0
        %963 = vmatprep.mubr.f32.mxu0 0.0
        %964 = vmatmul.mubr.f32.gmra.mrb[0].mxu0 %v897
        %v965 = vpop.f32.mrb[0].mxu0
        %v966 = vadd.f32 %v894, %v965
        %v967 = vpop.f32.mrb[0].mxu0
        %v968 = vadd.f32 %v894, %v967
        %969 = vdwg.mxu0
        %v970 = vmax.f32 %v966, 0.0
        %v971 = vmax.f32 %v968, 0.0
        %974 = vrot.lane.b32.xlu0 %v970, 34
        %v975 = vpop.permute.xlu0 %974
        %976 = vrot.lane.b32.xlu0 %v971, 34
        %v977 = vpop.permute.xlu0 %976
        %vm978 = vcmask 277504
        %v979 = vsel %vm978, %v975, %v977
        %v982 = vsel %vm978, 0.0, %v975
        %v983 = vsel %vm473, 1, 0
        %v984 = vsel %vm474, 1, 0
        %vm985 = vcmp.eq.s32.totalorder %v983, 1
        %vm986 = vcmp.eq.s32.totalorder %v984, 1
        %v987 = vsel %vm985, %v982, 0.0
        %v988 = vsel %vm986, %v979, 0.0
        %989 = vrot.lane.b32.xlu0 %v970, 33
        %v990 = vpop.permute.xlu0 %989
        %991 = vrot.lane.b32.xlu0 %v971, 33
        %v992 = vpop.permute.xlu0 %991
        %vm993 = vcmask 269312
        %v994 = vsel %vm993, %v990, %v992
        %v997 = vsel %vm993, 0.0, %v990
        %v998 = vsel %vm688, %v997, 0.0
        %v999 = vsel %vm689, %v994, 0.0
        %1000 = vrot.lane.b32.xlu0 %v970, 32
        %v1001 = vpop.permute.xlu0 %1000
        %1002 = vrot.lane.b32.xlu0 %v971, 32
        %v1003 = vpop.permute.xlu0 %1002
        %vm1004 = vcmask 261120
        %v1005 = vsel %vm1004, %v1001, %v1003
        %v1008 = vsel %vm1004, 0.0, %v1001
        %1009 = vrot.lane.b32.xlu0 %v970, 31
        %v1010 = vpop.permute.xlu0 %1009
        %1011 = vrot.lane.b32.xlu0 %v971, 31
        %v1012 = vpop.permute.xlu0 %1011
        %vm1013 = vcmask 252928
        %v1014 = vsel %vm1013, %v1010, %v1012
        %v1017 = vsel %vm1013, 0.0, %v1010
        %v1018 = vsel %vm711, %v1017, 0.0
        %v1019 = vsel %vm712, %v1014, 0.0
        %1020 = vrot.lane.b32.xlu0 %v970, 30
        %v1021 = vpop.permute.xlu0 %1020
        %1022 = vrot.lane.b32.xlu0 %v971, 30
        %v1023 = vpop.permute.xlu0 %1022
        %vm1024 = vcmask 244736
        %v1025 = vsel %vm1024, %v1021, %v1023
        %v1028 = vsel %vm1024, 0.0, %v1021
        %v1029 = vsel %vm497, 1, 0
        %v1030 = vsel %vm498, 1, 0
        %vm1031 = vcmp.eq.s32.totalorder %v1029, 1
        %vm1032 = vcmp.eq.s32.totalorder %v1030, 1
        %v1033 = vsel %vm1031, %v1028, 0.0
        %v1034 = vsel %vm1032, %v1025, 0.0
        %1035 = vrot.lane.b32.xlu0 %v970, 18
        %v1036 = vpop.permute.xlu0 %1035
        %1037 = vrot.lane.b32.xlu0 %v971, 18
        %v1038 = vpop.permute.xlu0 %1037
        %vm1039 = vcmask 146432
        %v1040 = vsel %vm1039, %v1036, %v1038
        %v1043 = vsel %vm1039, 0.0, %v1036
        %v1044 = vsel %vm985, %v1043, 0.0
        %v1045 = vsel %vm986, %v1040, 0.0
        %1046 = vrot.lane.b32.xlu0 %v970, 17
        %v1047 = vpop.permute.xlu0 %1046
        %1048 = vrot.lane.b32.xlu0 %v971, 17
        %v1049 = vpop.permute.xlu0 %1048
        %v1050 = vsel %vm681, %v1047, %v1049
        %v1053 = vsel %vm681, 0.0, %v1047
        %v1054 = vsel %vm688, %v1053, 0.0
        %v1055 = vsel %vm689, %v1050, 0.0
        %1056 = vrot.lane.b32.xlu0 %v970, 16
        %v1057 = vpop.permute.xlu0 %1056
        %1058 = vrot.lane.b32.xlu0 %v971, 16
        %v1059 = vpop.permute.xlu0 %1058
        %v1060 = vsel %vm696, %v1057, %v1059
        %v1062 = vsel %vm696, 0.0, %v1057
        %1063 = vrot.lane.b32.xlu0 %v970, 15
        %v1064 = vpop.permute.xlu0 %1063
        %1065 = vrot.lane.b32.xlu0 %v971, 15
        %v1066 = vpop.permute.xlu0 %1065
        %v1067 = vsel %vm704, %v1064, %v1066
        %v1070 = vsel %vm704, 0.0, %v1064
        %v1071 = vsel %vm711, %v1070, 0.0
        %v1072 = vsel %vm712, %v1067, 0.0
        %1073 = vrot.lane.b32.xlu0 %v970, 14
        %v1074 = vpop.permute.xlu0 %1073
        %1075 = vrot.lane.b32.xlu0 %v971, 14
        %v1076 = vpop.permute.xlu0 %1075
        %vm1077 = vcmask 113664
        %v1078 = vsel %vm1077, %v1074, %v1076
        %v1081 = vsel %vm1077, 0.0, %v1074
        %v1082 = vsel %vm1031, %v1081, 0.0
        %v1083 = vsel %vm1032, %v1078, 0.0
        %1084 = vrot.lane.b32.xlu0 %v970, 2
        %v1085 = vpop.permute.xlu0 %1084
        %1086 = vrot.lane.b32.xlu0 %v971, 2
        %v1087 = vpop.permute.xlu0 %1086
        %vm1088 = vcmask 15360
        %v1089 = vsel %vm1088, %v1085, %v1087
        %v1092 = vsel %vm1088, 0.0, %v1085
        %v1093 = vsel %vm985, %v1092, 0.0
        %v1094 = vsel %vm986, %v1089, 0.0
        %1095 = vrot.lane.b32.xlu0 %v970, 1
        %v1096 = vpop.permute.xlu0 %1095
        %1097 = vrot.lane.b32.xlu0 %v971, 1
        %v1098 = vpop.permute.xlu0 %1097
        %v1099 = vsel %vm719, %v1096, %v1098
        %v1102 = vsel %vm719, 0.0, %v1096
        %v1103 = vsel %vm688, %v1102, 0.0
        %v1104 = vsel %vm689, %v1099, 0.0
        %1105 = vrot.lane.b32.xlu0 %v970, 127
        %v1106 = vpop.permute.xlu0 %1105
        %1107 = vrot.lane.b32.xlu0 %v971, 127
        %v1108 = vpop.permute.xlu0 %1107
        %v1109 = vsel %vm730, %v1106, %v1108
        %v1112 = vsel %vm730, %v1108, 0.0
        %v1113 = vsel %vm711, %v1109, 0.0
        %v1114 = vsel %vm712, %v1112, 0.0
        %1115 = vrot.lane.b32.xlu0 %v970, 126
        %v1116 = vpop.permute.xlu0 %1115
        %1117 = vrot.lane.b32.xlu0 %v971, 126
        %v1118 = vpop.permute.xlu0 %1117
        %vm1119 = vcmask 1031168
        %v1120 = vsel %vm1119, %v1116, %v1118
        %v1123 = vsel %vm1119, %v1118, 0.0
        %v1124 = vsel %vm1031, %v1120, 0.0
        %v1125 = vsel %vm1032, %v1123, 0.0
        %1126 = vrot.lane.b32.xlu0 %v970, 114
        %v1127 = vpop.permute.xlu0 %1126
        %1128 = vrot.lane.b32.xlu0 %v971, 114
        %v1129 = vpop.permute.xlu0 %1128
        %vm1130 = vcmask 932864
        %v1131 = vsel %vm1130, %v1127, %v1129
        %v1134 = vsel %vm1130, %v1129, 0.0
        %v1135 = vsel %vm985, %v1131, 0.0
        %v1136 = vsel %vm986, %v1134, 0.0
        %1137 = vrot.lane.b32.xlu0 %v970, 113
        %v1138 = vpop.permute.xlu0 %1137
        %1139 = vrot.lane.b32.xlu0 %v971, 113
        %v1140 = vpop.permute.xlu0 %1139
        %v1141 = vsel %vm741, %v1138, %v1140
        %v1144 = vsel %vm741, %v1140, 0.0
        %v1145 = vsel %vm688, %v1141, 0.0
        %v1146 = vsel %vm689, %v1144, 0.0
        %1147 = vrot.lane.b32.xlu0 %v970, 112
        %v1148 = vpop.permute.xlu0 %1147
        %1149 = vrot.lane.b32.xlu0 %v971, 112
        %v1150 = vpop.permute.xlu0 %1149
        %v1151 = vsel %vm752, %v1148, %v1150
        %v1153 = vsel %vm752, %v1150, 0.0
        %1154 = vrot.lane.b32.xlu0 %v970, 111
        %v1155 = vpop.permute.xlu0 %1154
        %1156 = vrot.lane.b32.xlu0 %v971, 111
        %v1157 = vpop.permute.xlu0 %1156
        %v1158 = vsel %vm760, %v1155, %v1157
        %v1161 = vsel %vm760, %v1157, 0.0
        %v1162 = vsel %vm711, %v1158, 0.0
        %v1163 = vsel %vm712, %v1161, 0.0
        %1164 = vrot.lane.b32.xlu0 %v970, 110
        %v1165 = vpop.permute.xlu0 %1164
        %1166 = vrot.lane.b32.xlu0 %v971, 110
        %v1167 = vpop.permute.xlu0 %1166
        %vm1168 = vcmask 900096
        %v1169 = vsel %vm1168, %v1165, %v1167
        %v1172 = vsel %vm1168, %v1167, 0.0
        %v1173 = vsel %vm1031, %v1169, 0.0
        %v1174 = vsel %vm1032, %v1172, 0.0
        %1175 = vrot.lane.b32.xlu0 %v970, 98
        %v1176 = vpop.permute.xlu0 %1175
        %1177 = vrot.lane.b32.xlu0 %v971, 98
        %v1178 = vpop.permute.xlu0 %1177
        %vm1179 = vcmask 801792
        %v1180 = vsel %vm1179, %v1176, %v1178
        %v1183 = vsel %vm1179, %v1178, 0.0
        %v1184 = vsel %vm985, %v1180, 0.0
        %v1185 = vsel %vm986, %v1183, 0.0
        %1186 = vrot.lane.b32.xlu0 %v970, 97
        %v1187 = vpop.permute.xlu0 %1186
        %1188 = vrot.lane.b32.xlu0 %v971, 97
        %v1189 = vpop.permute.xlu0 %1188
        %vm1190 = vcmask 793600
        %v1191 = vsel %vm1190, %v1187, %v1189
        %v1194 = vsel %vm1190, %v1189, 0.0
        %v1195 = vsel %vm688, %v1191, 0.0
        %v1196 = vsel %vm689, %v1194, 0.0
        %1197 = vrot.lane.b32.xlu0 %v970, 96
        %v1198 = vpop.permute.xlu0 %1197
        %1199 = vrot.lane.b32.xlu0 %v971, 96
        %v1200 = vpop.permute.xlu0 %1199
        %vm1201 = vcmask 785408
        %v1202 = vsel %vm1201, %v1198, %v1200
        %v1205 = vsel %vm1201, %v1200, 0.0
        %1206 = vrot.lane.b32.xlu0 %v970, 95
        %v1207 = vpop.permute.xlu0 %1206
        %1208 = vrot.lane.b32.xlu0 %v971, 95
        %v1209 = vpop.permute.xlu0 %1208
        %vm1210 = vcmask 777216
        %v1211 = vsel %vm1210, %v1207, %v1209
        %v1214 = vsel %vm1210, %v1209, 0.0
        %v1215 = vsel %vm711, %v1211, 0.0
        %v1216 = vsel %vm712, %v1214, 0.0
        %1217 = vrot.lane.b32.xlu0 %v970, 94
        %v1218 = vpop.permute.xlu0 %1217
        %1219 = vrot.lane.b32.xlu0 %v971, 94
        %v1220 = vpop.permute.xlu0 %1219
        %vm1221 = vcmask 769024
        %v1222 = vsel %vm1221, %v1218, %v1220
        %v1225 = vsel %vm1221, %v1220, 0.0
        %v1226 = vsel %vm1031, %v1222, 0.0
        %v1227 = vsel %vm1032, %v1225, 0.0
        %v1230 = vrot.slane %v998, 4
        %v1231 = vrot.slane %v999, 4
        %v1236 = vrot.slane %v1018, 4
        %v1237 = vrot.slane %v1019, 4
        %v1242 = vrot.slane %v1044, 4
        %v1243 = vrot.slane %v1045, 4
        %v1247 = vrot.slane %v1062, 4
        %v1248 = vrot.slane %v1060, 4
        %v1253 = vrot.slane %v1082, 4
        %v1254 = vrot.slane %v1083, 4
        %v1259 = vrot.slane %v1103, 4
        %v1260 = vrot.slane %v1104, 4
        %v1265 = vrot.slane %v1113, 4
        %v1266 = vrot.slane %v1114, 4
        %v1271 = vrot.slane %v1135, 4
        %v1272 = vrot.slane %v1136, 4
        %v1275 = vsel %vm512, %v987, %v1230
        %v1276 = vsel %vm512, %v988, %v1231
        %v1277 = vsel %vm512, %v1008, %v1236
        %v1278 = vsel %vm512, %v1005, %v1237
        %v1279 = vsel %vm512, %v1033, %v1242
        %v1280 = vsel %vm512, %v1034, %v1243
        %v1281 = vsel %vm512, %v1054, %v1247
        %v1282 = vsel %vm512, %v1055, %v1248
        %v1283 = vsel %vm512, %v1071, %v1253
        %v1284 = vsel %vm512, %v1072, %v1254
        %v1285 = vsel %vm512, %v1093, %v1259
        %v1286 = vsel %vm512, %v1094, %v1260
        %v1287 = vsel %vm512, %v970, %v1265
        %v1288 = vsel %vm512, %v971, %v1266
        %v1289 = vsel %vm512, %v1124, %v1271
        %v1290 = vsel %vm512, %v1125, %v1272
        %v1292 = vrot.slane %v1151, 4
        %v1293 = vrot.slane %v1153, 4
        %v1298 = vrot.slane %v1173, 4
        %v1299 = vrot.slane %v1174, 4
        %v1304 = vrot.slane %v1195, 4
        %v1305 = vrot.slane %v1196, 4
        %v1310 = vrot.slane %v1215, 4
        %v1311 = vrot.slane %v1216, 4
        %v1314 = vsel %vm512, %v1145, %v1292
        %v1315 = vsel %vm512, %v1146, %v1293
        %v1316 = vsel %vm512, %v1162, %v1298
        %v1317 = vsel %vm512, %v1163, %v1299
        %v1318 = vsel %vm512, %v1184, %v1304
        %v1319 = vsel %vm512, %v1185, %v1305
        %v1320 = vsel %vm512, %v1202, %v1310
        %v1321 = vsel %vm512, %v1205, %v1311
        %v1322 = vld [vmem:[%s9] sm:$0xff]
        %v1323 = vld [vmem:[%s10] sm:$0xff]
        %1325 = vset.pattern.permute.xlu0 0
        %1326 = vperm.xlu0 %1325, %v1323
        %v1327 = vpop.permute.xlu0 %1326
        %vm1329 = vcmask 818176
        %v1331 = vsel %vm1329, %v1322, 0
        %v1334 = vsel %vm512, %v1226, 0
        %v1337 = vsel %vm512, %v1227, 0
        %1339 = vmatprep.subr.mxu0 %v1276
        %1340 = vmatpush1.msra.mxu0 %v1275
        %1341 = vmatprep.subr.mxu0 %v1278
        %1342 = vmatpush1.msra.mxu0 %v1277
        %1343 = vmatprep.subr.mxu0 %v1280
        %1344 = vmatpush1.msra.mxu0 %v1279
        %1345 = vmatprep.subr.mxu0 %v1282
        %1346 = vmatpush1.msra.mxu0 %v1281
        %1347 = vmatprep.subr.mxu0 %v1284
        %1348 = vmatpush1.msra.mxu0 %v1283
        %1349 = vmatprep.subr.mxu0 %v1286
        %1350 = vmatpush1.msra.mxu0 %v1285
        %1351 = vmatprep.subr.mxu0 %v1288
        %1352 = vmatpush1.msra.mxu0 %v1287
        %1353 = vmatprep.subr.mxu0 %v1290
        %1354 = vmatpush1.msra.mxu0 %v1289
        %1355 = vmatprep.subr.mxu0 %v1315
        %1356 = vmatpush1.msra.mxu0 %v1314
        %1357 = vmatprep.subr.mxu0 %v1317
        %1358 = vmatpush1.msra.mxu0 %v1316
        %1359 = vmatprep.subr.mxu0 %v1319
        %1360 = vmatpush1.msra.mxu0 %v1318
        %1361 = vmatprep.subr.mxu0 %v1321
        %1362 = vmatpush1.msra.mxu0 %v1320
        %1363 = vmatprep.subr.mxu0 %v1337
        %1364 = vmatpush1.msra.mxu0 %v1334
        %1365 = vmatprep.subr.mxu0 0.0
        %1366 = vmatpush1.msra.mxu0 0.0
        %1367 = vmatprep.subr.mxu0 0.0
        %1368 = vmatpush1.msra.mxu0 0.0
        %1369 = vmatprep.subr.mxu0 0.0
        %1370 = vmatpush1.msra.mxu0 0.0
        %1371 = vmatprep.subr.mxu0 0.0
        %1372 = vmatpush1.msra.mxu0 0.0
        %1373 = vmatprep.subr.mxu0 0.0
        %1374 = vmatpush1.msra.mxu0 0.0
        %1375 = vmatprep.subr.mxu0 0.0
        %1376 = vmatpush1.msra.mxu0 0.0
        %1377 = vmatprep.subr.mxu0 0.0
        %1378 = vmatpush1.msra.mxu0 0.0
        %1379 = vmatprep.subr.mxu0 0.0
        %1380 = vmatpush1.msra.mxu0 0.0
        %1381 = vmatprep.subr.mxu0 0.0
        %1382 = vmatpush1.msra.mxu0 0.0
        %1383 = vmatprep.subr.mxu0 0.0
        %1384 = vmatpush1.msra.mxu0 0.0
        %1385 = vmatprep.subr.mxu0 0.0
        %1386 = vmatpush1.msra.mxu0 0.0
        %1387 = vmatprep.subr.mxu0 0.0
        %1388 = vmatpush1.msra.mxu0 0.0
        %1389 = vmatprep.subr.mxu0 0.0
        %1390 = vmatpush1.msra.mxu0 0.0
        %1391 = vmatprep.subr.mxu0 0.0
        %1392 = vmatpush1.msra.mxu0 0.0
        %1393 = vmatprep.subr.mxu0 0.0
        %1394 = vmatpush1.msra.mxu0 0.0
        %1395 = vmatprep.subr.mxu0 0.0
        %1396 = vmatpush1.msra.mxu0 0.0
        %1397 = vmatprep.subr.mxu0 0.0
        %1398 = vmatpush1.msra.mxu0 0.0
        %1399 = vmatprep.subr.mxu0 0.0
        %1400 = vmatpush1.msra.mxu0 0.0
        %1401 = vmatprep.subr.mxu0 0.0
        %1402 = vmatpush1.msra.mxu0 0.0
        %1403 = vmatprep.mubr.f32.mxu0 0.0
        %1404 = vmatmul.mubr.f32.gmra.mrb[0].mxu0 %v1331
        %v1405 = vpop.f32.mrb[0].mxu0
        %v1406 = vadd.f32 %v1327, %v1405
        %v1407 = vpop.f32.mrb[0].mxu0
        %v1408 = vadd.f32 %v1327, %v1407
        %1409 = vdwg.mxu0
        %v1410 = vmax.f32 %v1406, 0.0
        %v1411 = vmax.f32 %v1408, 0.0
        %1412 = vst [vmem:[%s433 + $0x20] sm:$0xff] %v1410
        %1413 = vst [vmem:[%s433 + $0x28] sm:$0xff] %v1411
        %1414 = vrot.lane.b32.xlu0 %v439, 17
        %v1415 = vpop.permute.xlu0 %1414
        %1416 = vrot.lane.b32.xlu0 %v507, 17
        %v1417 = vpop.permute.xlu0 %1416
        %v1418 = vsel %vm681, %v1415, %v1417
        %v1421 = vsel %vm681, -inf, %v1415
        %v1422 = vsel %vm688, %v1421, -inf
        %v1423 = vsel %vm689, %v1418, -inf
        %v1426 = vcombine.low %v1422, %v1423
        %v1428 = vmax.f32 %v439, %v1426
        %1429 = vrot.lane.b32.xlu0 %v439, 16
        %v1430 = vpop.permute.xlu0 %1429
        %1431 = vrot.lane.b32.xlu0 %v507, 16
        %v1432 = vpop.permute.xlu0 %1431
        %v1433 = vsel %vm696, %v1430, %v1432
        %v1435 = vsel %vm696, -inf, %v1430
        %v1437 = vcombine.low %v1435, %v1433
        %v1439 = vmax.f32 %v1428, %v1437
        %1440 = vrot.lane.b32.xlu0 %v439, 15
        %v1441 = vpop.permute.xlu0 %1440
        %1442 = vrot.lane.b32.xlu0 %v507, 15
        %v1443 = vpop.permute.xlu0 %1442
        %v1444 = vsel %vm704, %v1441, %v1443
        %v1447 = vsel %vm704, -inf, %v1441
        %v1448 = vsel %vm711, %v1447, -inf
        %v1449 = vsel %vm712, %v1444, -inf
        %v1452 = vcombine.low %v1448, %v1449
        %v1454 = vmax.f32 %v1439, %v1452
        %1455 = vrot.lane.b32.xlu0 %v439, 1
        %v1456 = vpop.permute.xlu0 %1455
        %1457 = vrot.lane.b32.xlu0 %v507, 1
        %v1458 = vpop.permute.xlu0 %1457
        %v1459 = vsel %vm719, %v1456, %v1458
        %v1462 = vsel %vm719, -inf, %v1456
        %v1463 = vsel %vm688, %v1462, -inf
        %v1464 = vsel %vm689, %v1459, -inf
        %v1467 = vcombine.low %v1463, %v1464
        %v1469 = vmax.f32 %v1454, %v1467
        %1470 = vrot.lane.b32.xlu0 %v439, 127
        %v1471 = vpop.permute.xlu0 %1470
        %1472 = vrot.lane.b32.xlu0 %v507, 127
        %v1473 = vpop.permute.xlu0 %1472
        %v1474 = vsel %vm730, %v1471, %v1473
        %v1477 = vsel %vm730, %v1473, -inf
        %v1478 = vsel %vm711, %v1474, -inf
        %v1479 = vsel %vm712, %v1477, -inf
        %v1482 = vcombine.low %v1478, %v1479
        %v1484 = vmax.f32 %v1469, %v1482
        %1485 = vrot.lane.b32.xlu0 %v439, 113
        %v1486 = vpop.permute.xlu0 %1485
        %1487 = vrot.lane.b32.xlu0 %v507, 113
        %v1488 = vpop.permute.xlu0 %1487
        %v1489 = vsel %vm741, %v1486, %v1488
        %v1492 = vsel %vm741, %v1488, -inf
        %v1493 = vsel %vm688, %v1489, -inf
        %v1494 = vsel %vm689, %v1492, -inf
        %v1497 = vcombine.low %v1493, %v1494
        %v1499 = vmax.f32 %v1484, %v1497
        %1500 = vrot.lane.b32.xlu0 %v439, 112
        %v1501 = vpop.permute.xlu0 %1500
        %1502 = vrot.lane.b32.xlu0 %v507, 112
        %v1503 = vpop.permute.xlu0 %1502
        %v1504 = vsel %vm752, %v1501, %v1503
        %v1506 = vsel %vm752, %v1503, -inf
        %v1508 = vcombine.low %v1504, %v1506
        %v1510 = vmax.f32 %v1499, %v1508
        %1511 = vrot.lane.b32.xlu0 %v439, 111
        %v1512 = vpop.permute.xlu0 %1511
        %1513 = vrot.lane.b32.xlu0 %v507, 111
        %v1514 = vpop.permute.xlu0 %1513
        %v1515 = vsel %vm760, %v1512, %v1514
        %v1518 = vsel %vm760, %v1514, -inf
        %v1519 = vsel %vm711, %v1515, -inf
        %v1520 = vsel %vm712, %v1518, -inf
        %v1523 = vcombine.low %v1519, %v1520
        %v1525 = vmax.f32 %v1510, %v1523
        %v1526 = vld [vmem:[%s11] sm:$0xff]
        %v1527 = vld [vmem:[%s12] sm:$0xff]
        %1529 = vset.pattern.permute.xlu0 0
        %1530 = vperm.xlu0 %1529, %v1527
        %v1531 = vpop.permute.xlu0 %1530
        %v1534 = vcombine.high %v1525, %v1525
        %v1536 = vsel %vm508, %v1526, 0
        %v1538 = vsel %vm512, %v1525, 0
        %v1540 = vsel %vm512, %v1534, 0
        %1542 = vmatprep.subr.mxu0 %v1540
        %1543 = vmatpush1.msra.mxu0 %v1538
        %1544 = vmatprep.subr.mxu0 0.0
        %1545 = vmatpush1.msra.mxu0 0.0
        %1546 = vmatprep.subr.mxu0 0.0
        %1547 = vmatpush1.msra.mxu0 0.0
        %1548 = vmatprep.subr.mxu0 0.0
        %1549 = vmatpush1.msra.mxu0 0.0
        %1550 = vmatprep.subr.mxu0 0.0
        %1551 = vmatpush1.msra.mxu0 0.0
        %1552 = vmatprep.subr.mxu0 0.0
        %1553 = vmatpush1.msra.mxu0 0.0
        %1554 = vmatprep.subr.mxu0 0.0
        %1555 = vmatpush1.msra.mxu0 0.0
        %1556 = vmatprep.subr.mxu0 0.0
        %1557 = vmatpush1.msra.mxu0 0.0
        %1558 = vmatprep.subr.mxu0 0.0
        %1559 = vmatpush1.msra.mxu0 0.0
        %1560 = vmatprep.subr.mxu0 0.0
        %1561 = vmatpush1.msra.mxu0 0.0
        %1562 = vmatprep.subr.mxu0 0.0
        %1563 = vmatpush1.msra.mxu0 0.0
        %1564 = vmatprep.subr.mxu0 0.0
        %1565 = vmatpush1.msra.mxu0 0.0
        %1566 = vmatprep.subr.mxu0 0.0
        %1567 = vmatpush1.msra.mxu0 0.0
        %1568 = vmatprep.subr.mxu0 0.0
        %1569 = vmatpush1.msra.mxu0 0.0
        %1570 = vmatprep.subr.mxu0 0.0
        %1571 = vmatpush1.msra.mxu0 0.0
        %1572 = vmatprep.subr.mxu0 0.0
        %1573 = vmatpush1.msra.mxu0 0.0
        %1574 = vmatprep.subr.mxu0 0.0
        %1575 = vmatpush1.msra.mxu0 0.0
        %1576 = vmatprep.subr.mxu0 0.0
        %1577 = vmatpush1.msra.mxu0 0.0
        %1578 = vmatprep.subr.mxu0 0.0
        %1579 = vmatpush1.msra.mxu0 0.0
        %1580 = vmatprep.subr.mxu0 0.0
        %1581 = vmatpush1.msra.mxu0 0.0
        %1582 = vmatprep.subr.mxu0 0.0
        %1583 = vmatpush1.msra.mxu0 0.0
        %1584 = vmatprep.subr.mxu0 0.0
        %1585 = vmatpush1.msra.mxu0 0.0
        %1586 = vmatprep.subr.mxu0 0.0
        %1587 = vmatpush1.msra.mxu0 0.0
        %1588 = vmatprep.subr.mxu0 0.0
        %1589 = vmatpush1.msra.mxu0 0.0
        %1590 = vmatprep.subr.mxu0 0.0
        %1591 = vmatpush1.msra.mxu0 0.0
        %1592 = vmatprep.subr.mxu0 0.0
        %1593 = vmatpush1.msra.mxu0 0.0
        %1594 = vmatprep.subr.mxu0 0.0
        %1595 = vmatpush1.msra.mxu0 0.0
        %1596 = vmatprep.subr.mxu0 0.0
        %1597 = vmatpush1.msra.mxu0 0.0
        %1598 = vmatprep.subr.mxu0 0.0
        %1599 = vmatpush1.msra.mxu0 0.0
        %1600 = vmatprep.subr.mxu0 0.0
        %1601 = vmatpush1.msra.mxu0 0.0
        %1602 = vmatprep.subr.mxu0 0.0
        %1603 = vmatpush1.msra.mxu0 0.0
        %1604 = vmatprep.subr.mxu0 0.0
        %1605 = vmatpush1.msra.mxu0 0.0
        %1606 = vmatprep.mubr.f32.mxu0 0.0
        %1607 = vmatmul.mubr.f32.gmra.mrb[0].mxu0 %v1536
        %v1608 = vpop.f32.mrb[0].mxu0
        %v1609 = vadd.f32 %v1531, %v1608
        %v1610 = vpop.f32.mrb[0].mxu0
        %v1611 = vadd.f32 %v1531, %v1610
        %1612 = vdwg.mxu0
        %v1613 = vmax.f32 %v1609, 0.0
        %v1614 = vmax.f32 %v1611, 0.0
        %1615 = vst [vmem:[%s433 + $0x30] sm:$0xff] %v1613
        %1616 = vst [vmem:[%s433 + $0x38] sm:$0xff] %v1614
        %s1617 = sand.u32 %s313, 1
        %s1618 = scalar_lea.sflag [#allocation3], %s1617
        %s1619 = sand.u32 %s313, 1
        %s1620 = smul.addr %s1619, 64
        %s1621 = scalar_lea.vmem [#allocation2], %s1620
        // Predicated region
        $region73: #{tpu_custom_call.1} parent=71 // pred_check
          %p1622 = pneg %p323
        $region74: #{tpu_custom_call.1} parent=71 // pred_check_branch
          %1624 = sbr.rel (%p1622) target = $region76
        $region75: #{tpu_custom_call.1} parent=71 // pred_region
          %s1626 = ssub.s32 1024, 1024
          %1627 = vsyncadd %s1618, %s1626
          %s1628 = smul.addr %s27, 8
          %s1629 = smul.addr %s1628, 128
          %s1630 = scalar_lea.hbm %s13, %s1629
          %s1631 = sshll.u32 %s1621, 4
          %s1632 = int_to_ptr.vmem [resolvable:$true] %s1631
          %1637 = dma.vmem_to_hbm [thread:$0]  %s1632, 1024, %s1630, %s1618, 256, 256, 16
        $region76: #{tpu_custom_call.1} parent=71 // pred_fallthru
          _
      $region72: #{tpu_custom_call.1} parent=5 // pred_fallthru
        _
      %p1638 = scmp.le.s32.totalorder 2, %s22
      // Predicated region
      $region77: #{tpu_custom_call.1} parent=5 // pred_check
        %p1639 = pneg %p1638
      $region78: #{tpu_custom_call.1} parent=5 // pred_check_branch
        %1641 = sbr.rel (%p1639) target = $region80
      $region79: #{tpu_custom_call.1} parent=5 // pred_region
        %s1642 = ssub.s32 %s22, 2
        // Predicated region
        $region81: #{tpu_custom_call.1} parent=79 // pred_check
          %p1643 = pneg %p329
        $region82: #{tpu_custom_call.1} parent=79 // pred_check_branch
          %1645 = sbr.rel (%p1643) target = $region84
        $region83: #{tpu_custom_call.1} parent=79 // pred_region
          %s1646 = sand.u32 %s314, 1
          %s1647 = scalar_lea.sflag [#allocation3], %s1646
          %s1648 = sand.u32 %s314, 1
          %s1649 = smul.addr %s1648, 64
          %s1650 = scalar_lea.vmem [#allocation2], %s1649
          %1651 = dma.done %s1647, 1024
        $region84: #{tpu_custom_call.1} parent=79 // pred_fallthru
          _
      $region80: #{tpu_custom_call.1} parent=5 // pred_fallthru
        _
    $region6: #{tpu_custom_call.1} parent=1 // loop_footer
      %s26 = sadd.s32 1, %s22
    $region7: #{tpu_custom_call.1} parent=1 // loop_footer_branch
      %21 = sbr.rel target = $region3
    $region8: #{tpu_custom_call.1} parent=1 // loop_exit
      _
    %1652 = vsyncpa [#allocation3], 1
    %s1653 = scalar_lea.sflag [#allocation3], 1
    %1654 = vsyncpa %s1653, 1

</llo_original>
